<compile_context>
chip_gen: v6e
topology: v6e:2x2x1
jax: 0.10.0
libtpu: 0.0.40
codegen_flags: <defaults>
</compile_context>

<pallas_src>
import jax
import jax.numpy as jnp
from jax.experimental import pallas as pl
from jax.experimental.pallas import tpu as pltpu


def _sdf_mlp_kernel(xt_ref, w1_ref, w2_ref, b2_ref, w3_ref, b3_ref,
                    w4_ref, b4_ref, o_ref):
    # xt_ref: (4, TN) bf16 tile of [x^T ; ones] -- layer-1 bias is folded into w1.
    xt = xt_ref[...]

    # Layer 1: (H, 4) @ (4, TN) -> (H, TN), f32 accumulate, ReLU on the f32 accumulator.
    h = jnp.dot(w1_ref[...], xt, preferred_element_type=jnp.float32)
    h = jnp.maximum(h, 0.0)

    # Layer 2: Linear(H, H) + ReLU
    h = jnp.dot(w2_ref[...], h.astype(jnp.bfloat16),
                preferred_element_type=jnp.float32) + b2_ref[...]
    h = jnp.maximum(h, 0.0)

    # Layer 3: Linear(H, H) + ReLU
    h = jnp.dot(w3_ref[...], h.astype(jnp.bfloat16),
                preferred_element_type=jnp.float32) + b3_ref[...]
    h = jnp.maximum(h, 0.0)

    # Layer 4: Linear(H, 1), zero-padded to 8 output rows; only row 0 is the SDF value.
    o = jnp.dot(w4_ref[...], h.astype(jnp.bfloat16),
                preferred_element_type=jnp.float32) + b4_ref[...]
    o_ref[...] = o[0:1, :].astype(o_ref.dtype)


def sdf_mlp_forward(x, params, *, tile_n=1024):
    """x: (N, 3) float32. params: PyTorch-layout (out, in) weights + (out,) biases.

    Returns (N, 1). N is padded internally to a multiple of tile_n; padded rows are dropped.
    """
    N, in_dim = x.shape
    assert in_dim == 3
    H = params["w1"].shape[0]

    n_tiles = pl.cdiv(N, tile_n)
    Np = n_tiles * tile_n

    # Feature-major input with a ones row (folds the layer-1 bias into w1): (4, Np) bf16.
    x32 = x.astype(jnp.float32)
    xt = jnp.concatenate([x32.T, jnp.ones((1, N), jnp.float32)], axis=0)
    if Np != N:
        xt = jnp.pad(xt, ((0, 0), (0, Np - N)))
    xt = xt.astype(jnp.bfloat16)

    # Weights in native PyTorch (out, in) layout, cast to bf16 for the MXU.
    w1 = jnp.concatenate([params["w1"], params["b1"][:, None]],
                         axis=1).astype(jnp.bfloat16)                      # (H, 4)
    w2 = params["w2"].astype(jnp.bfloat16)                                 # (H, H)
    w3 = params["w3"].astype(jnp.bfloat16)                                 # (H, H)
    w4 = jnp.concatenate([params["w4"], jnp.zeros((7, H), jnp.float32)],
                         axis=0).astype(jnp.bfloat16)                      # (8, H)
    # Biases stay f32 (added to the f32 accumulator; v5e VPU has no bf16).
    b2 = params["b2"].astype(jnp.float32).reshape(H, 1)
    b3 = params["b3"].astype(jnp.float32).reshape(H, 1)
    b4 = jnp.concatenate([params["b4"].astype(jnp.float32),
                          jnp.zeros((7,), jnp.float32)]).reshape(8, 1)

    full = lambda shape: pl.BlockSpec(shape, lambda i: (0, 0))

    flops = 2 * Np * (4 * H + H * H + H * H + 8 * H)
    bytes_accessed = (xt.size * 2 + Np * 4
                      + (w1.size + w2.size + w3.size + w4.size) * 2
                      + (b2.size + b3.size + b4.size) * 4)

    out = pl.pallas_call(
        _sdf_mlp_kernel,
        out_shape=jax.ShapeDtypeStruct((1, Np), jnp.float32),
        grid_spec=pltpu.PrefetchScalarGridSpec(
            num_scalar_prefetch=0,
            grid=(n_tiles,),
            in_specs=[
                pl.BlockSpec((4, tile_n), lambda i: (0, i)),   # x^T tile (batch on lanes)
                full((H, 4)),                                  # layer 1 (bias folded)
                full((H, H)), full((H, 1)),                    # layer 2
                full((H, H)), full((H, 1)),                    # layer 3
                full((8, H)), full((8, 1)),                    # layer 4 (padded to 8 rows)
            ],
            out_specs=pl.BlockSpec((1, tile_n), lambda i: (0, i)),
        ),
        compiler_params=pltpu.CompilerParams(
            dimension_semantics=("parallel",)),
        cost_estimate=pl.CostEstimate(
            flops=int(flops), transcendentals=0, bytes_accessed=int(bytes_accessed)),
    )(xt, w1, w2, b2, w3, b3, w4, b4)

    return out[0, :N].reshape(N, 1).astype(x.dtype)


def init_params(key, hidden_dim=128):
    """Deterministic synthetic init matching nn.Linear shapes (out, in) / (out,)."""
    ks = jax.random.split(key, 8)

    def lin(kw, kb, out_f, in_f):
        bound = 1.0 / jnp.sqrt(in_f)
        w = jax.random.uniform(kw, (out_f, in_f), jnp.float32, -bound, bound)
        b = jax.random.uniform(kb, (out_f,), jnp.float32, -bound, bound)
        return w, b

    w1, b1 = lin(ks[0], ks[1], hidden_dim, 3)
    w2, b2 = lin(ks[2], ks[3], hidden_dim, hidden_dim)
    w3, b3 = lin(ks[4], ks[5], hidden_dim, hidden_dim)
    w4, b4 = lin(ks[6], ks[7], 1, hidden_dim)
    return dict(w1=w1, b1=b1, w2=w2, b2=b2, w3=w3, b3=b3, w4=w4, b4=b4)


def reference_forward(x, p):
    """Pure-f32 module semantics (the PyTorch forward)."""
    h = jnp.maximum(x @ p["w1"].T + p["b1"], 0.0)
    h = jnp.maximum(h @ p["w2"].T + p["b2"], 0.0)
    h = jnp.maximum(h @ p["w3"].T + p["b3"], 0.0)
    return h @ p["w4"].T + p["b4"]


def reference_forward_bf16(x, p):
    """Same network with the kernel's bf16-in / f32-accumulate numerics."""
    c = lambda a: a.astype(jnp.bfloat16)
    h = jnp.dot(c(x), c(p["w1"]).T, preferred_element_type=jnp.float32) \
        + c(p["b1"]).astype(jnp.float32)
    h = jnp.maximum(h, 0.0)
    h = jnp.dot(c(h), c(p["w2"]).T, preferred_element_type=jnp.float32) + p["b2"]
    h = jnp.maximum(h, 0.0)
    h = jnp.dot(c(h), c(p["w3"]).T, preferred_element_type=jnp.float32) + p["b3"]
    h = jnp.maximum(h, 0.0)
    return jnp.dot(c(h), c(p["w4"]).T, preferred_element_type=jnp.float32) + p["b4"]


if __name__ == "__main__":
    key = jax.random.PRNGKey(0)
    k_param, k_x = jax.random.split(key)

    hidden_dim = 128   # module default
    N = 4096           # 3-D query points -> grid of 4 tiles of 1024 (even, >= 2 for v7x)

    params = init_params(k_param, hidden_dim=hidden_dim)
    x = jax.random.normal(k_x, (N, 3), dtype=jnp.float32)

    y = sdf_mlp_forward(x, params, tile_n=1024)
    y = jax.block_until_ready(y)
    assert y.shape == (N, 1)

    # Tight check vs. a reference using the same bf16-in / f32-accumulate math.
    y_bf16 = reference_forward_bf16(x, params)
    assert jnp.allclose(y, y_bf16, atol=5e-3, rtol=5e-3), "mismatch vs bf16 reference"

    # Loose check vs. the pure-f32 module semantics (only bf16 quantization noise expected).
    y_ref = reference_forward(x, params)
    assert jnp.allclose(y, y_ref, atol=1e-1, rtol=1e-1), "mismatch vs f32 reference"

    print("KERNEL_OK")
</pallas_src>

<mosaic_0001>
module attributes {stable_mosaic.version = 11 : i64} {
  func.func @_sdf_mlp_kernel(%arg0: i32, %arg1: memref<4x1024xbf16, #tpu.memory_space<vmem>>, %arg2: memref<128x4xbf16, #tpu.memory_space<vmem>>, %arg3: memref<128x128xbf16, #tpu.memory_space<vmem>>, %arg4: memref<128x1xf32, #tpu.memory_space<vmem>>, %arg5: memref<128x128xbf16, #tpu.memory_space<vmem>>, %arg6: memref<128x1xf32, #tpu.memory_space<vmem>>, %arg7: memref<8x128xbf16, #tpu.memory_space<vmem>>, %arg8: memref<8x1xf32, #tpu.memory_space<vmem>>, %arg9: memref<1x1024xf32, #tpu.memory_space<vmem>>) attributes {dimension_semantics = [#tpu.dimension_semantics<parallel>], iteration_bounds = array<i64: 4>, scalar_prefetch = 0 : i64, scratch_operands = 0 : i64, tpu.core_type = #tpu.core_type<tc>, window_params = [{transform_indices = @transform_0, window_bounds = array<i64: 4, 1024>}, {pipeline_mode = #tpu.pipeline_mode<synchronous>, transform_indices = @transform_1, window_bounds = array<i64: 128, 4>}, {pipeline_mode = #tpu.pipeline_mode<synchronous>, transform_indices = @transform_2, window_bounds = array<i64: 128, 128>}, {pipeline_mode = #tpu.pipeline_mode<synchronous>, transform_indices = @transform_3, window_bounds = array<i64: 128, 1>}, {pipeline_mode = #tpu.pipeline_mode<synchronous>, transform_indices = @transform_4, window_bounds = array<i64: 128, 128>}, {pipeline_mode = #tpu.pipeline_mode<synchronous>, transform_indices = @transform_5, window_bounds = array<i64: 128, 1>}, {pipeline_mode = #tpu.pipeline_mode<synchronous>, transform_indices = @transform_6, window_bounds = array<i64: 8, 128>}, {pipeline_mode = #tpu.pipeline_mode<synchronous>, transform_indices = @transform_7, window_bounds = array<i64: 8, 1>}, {transform_indices = @transform_8, window_bounds = array<i64: 1, 1024>}]} {
    %c0 = arith.constant 0 : index
    %c0_0 = arith.constant 0 : index
    %0 = vector.load %arg1[%c0, %c0_0] : memref<4x1024xbf16, #tpu.memory_space<vmem>>, vector<4x1024xbf16>
    %c0_1 = arith.constant 0 : index
    %c0_2 = arith.constant 0 : index
    %1 = vector.load %arg2[%c0_1, %c0_2] : memref<128x4xbf16, #tpu.memory_space<vmem>>, vector<128x4xbf16>
    %cst = arith.constant dense<0.000000e+00> : vector<128x1024xf32>
    %2 = tpu.matmul %1, %0, %cst {dimension_numbers = #tpu.dot_dimension_numbers<[1], [0], [0], [1], [0, 0, 1, 1], [], []>} : vector<128x4xbf16>, vector<4x1024xbf16>, vector<128x1024xf32> -> vector<128x1024xf32>
    %cst_3 = arith.constant 0.000000e+00 : f32
    %3 = vector.broadcast %cst_3 : f32 to vector<128x1024xf32>
    %4 = arith.maximumf %2, %3 : vector<128x1024xf32>
    %c0_4 = arith.constant 0 : index
    %c0_5 = arith.constant 0 : index
    %5 = vector.load %arg3[%c0_4, %c0_5] : memref<128x128xbf16, #tpu.memory_space<vmem>>, vector<128x128xbf16>
    %6 = arith.truncf %4 : vector<128x1024xf32> to vector<128x1024xbf16>
    %cst_6 = arith.constant dense<0.000000e+00> : vector<128x1024xf32>
    %7 = tpu.matmul %5, %6, %cst_6 {dimension_numbers = #tpu.dot_dimension_numbers<[1], [0], [0], [1], [0, 0, 1, 1], [], []>} : vector<128x128xbf16>, vector<128x1024xbf16>, vector<128x1024xf32> -> vector<128x1024xf32>
    %c0_7 = arith.constant 0 : index
    %c0_8 = arith.constant 0 : index
    %8 = vector.load %arg4[%c0_7, %c0_8] : memref<128x1xf32, #tpu.memory_space<vmem>>, vector<128x1xf32>
    %9 = vector.broadcast %8 : vector<128x1xf32> to vector<128x1024xf32>
    %10 = arith.addf %7, %9 : vector<128x1024xf32>
    %cst_9 = arith.constant 0.000000e+00 : f32
    %11 = vector.broadcast %cst_9 : f32 to vector<128x1024xf32>
    %12 = arith.maximumf %10, %11 : vector<128x1024xf32>
    %c0_10 = arith.constant 0 : index
    %c0_11 = arith.constant 0 : index
    %13 = vector.load %arg5[%c0_10, %c0_11] : memref<128x128xbf16, #tpu.memory_space<vmem>>, vector<128x128xbf16>
    %14 = arith.truncf %12 : vector<128x1024xf32> to vector<128x1024xbf16>
    %cst_12 = arith.constant dense<0.000000e+00> : vector<128x1024xf32>
    %15 = tpu.matmul %13, %14, %cst_12 {dimension_numbers = #tpu.dot_dimension_numbers<[1], [0], [0], [1], [0, 0, 1, 1], [], []>} : vector<128x128xbf16>, vector<128x1024xbf16>, vector<128x1024xf32> -> vector<128x1024xf32>
    %c0_13 = arith.constant 0 : index
    %c0_14 = arith.constant 0 : index
    %16 = vector.load %arg6[%c0_13, %c0_14] : memref<128x1xf32, #tpu.memory_space<vmem>>, vector<128x1xf32>
    %17 = vector.broadcast %16 : vector<128x1xf32> to vector<128x1024xf32>
    %18 = arith.addf %15, %17 : vector<128x1024xf32>
    %cst_15 = arith.constant 0.000000e+00 : f32
    %19 = vector.broadcast %cst_15 : f32 to vector<128x1024xf32>
    %20 = arith.maximumf %18, %19 : vector<128x1024xf32>
    %c0_16 = arith.constant 0 : index
    %c0_17 = arith.constant 0 : index
    %21 = vector.load %arg7[%c0_16, %c0_17] : memref<8x128xbf16, #tpu.memory_space<vmem>>, vector<8x128xbf16>
    %22 = arith.truncf %20 : vector<128x1024xf32> to vector<128x1024xbf16>
    %cst_18 = arith.constant dense<0.000000e+00> : vector<8x1024xf32>
    %23 = tpu.matmul %21, %22, %cst_18 {dimension_numbers = #tpu.dot_dimension_numbers<[1], [0], [0], [1], [0, 0, 1, 1], [], []>} : vector<8x128xbf16>, vector<128x1024xbf16>, vector<8x1024xf32> -> vector<8x1024xf32>
    %c0_19 = arith.constant 0 : index
    %c0_20 = arith.constant 0 : index
    %24 = vector.load %arg8[%c0_19, %c0_20] : memref<8x1xf32, #tpu.memory_space<vmem>>, vector<8x1xf32>
    %25 = vector.broadcast %24 : vector<8x1xf32> to vector<8x1024xf32>
    %26 = arith.addf %23, %25 : vector<8x1024xf32>
    %27 = vector.extract_strided_slice %26 {offsets = [0, 0], sizes = [1, 1024], strides = [1, 1]} : vector<8x1024xf32> to vector<1x1024xf32>
    %c0_21 = arith.constant 0 : index
    %c0_22 = arith.constant 0 : index
    %28 = vector.load %arg9[%c0_21, %c0_22] : memref<1x1024xf32, #tpu.memory_space<vmem>>, vector<1x1024xf32>
    tpu.vector_store %arg9[%c0_21, %c0_22], %27 {strides = array<i32>} : memref<1x1024xf32, #tpu.memory_space<vmem>>, vector<1x1024xf32>,
    return
  }
  func.func @transform_0(%arg0: i32) -> (i32, i32) {
    %c0_i32 = arith.constant 0 : i32
    %c0_i32_0 = arith.constant 0 : i32
    return %c0_i32, %arg0 : i32, i32
  }
  func.func @transform_1(%arg0: i32) -> (i32, i32) {
    %c0_i32 = arith.constant 0 : i32
    %c0_i32_0 = arith.constant 0 : i32
    %c0_i32_1 = arith.constant 0 : i32
    return %c0_i32, %c0_i32_0 : i32, i32
  }
  func.func @transform_2(%arg0: i32) -> (i32, i32) {
    %c0_i32 = arith.constant 0 : i32
    %c0_i32_0 = arith.constant 0 : i32
    %c0_i32_1 = arith.constant 0 : i32
    return %c0_i32, %c0_i32_0 : i32, i32
  }
  func.func @transform_3(%arg0: i32) -> (i32, i32) {
    %c0_i32 = arith.constant 0 : i32
    %c0_i32_0 = arith.constant 0 : i32
    %c0_i32_1 = arith.constant 0 : i32
    return %c0_i32, %c0_i32_0 : i32, i32
  }
  func.func @transform_4(%arg0: i32) -> (i32, i32) {
    %c0_i32 = arith.constant 0 : i32
    %c0_i32_0 = arith.constant 0 : i32
    %c0_i32_1 = arith.constant 0 : i32
    return %c0_i32, %c0_i32_0 : i32, i32
  }
  func.func @transform_5(%arg0: i32) -> (i32, i32) {
    %c0_i32 = arith.constant 0 : i32
    %c0_i32_0 = arith.constant 0 : i32
    %c0_i32_1 = arith.constant 0 : i32
    return %c0_i32, %c0_i32_0 : i32, i32
  }
  func.func @transform_6(%arg0: i32) -> (i32, i32) {
    %c0_i32 = arith.constant 0 : i32
    %c0_i32_0 = arith.constant 0 : i32
    %c0_i32_1 = arith.constant 0 : i32
    return %c0_i32, %c0_i32_0 : i32, i32
  }
  func.func @transform_7(%arg0: i32) -> (i32, i32) {
    %c0_i32 = arith.constant 0 : i32
    %c0_i32_0 = arith.constant 0 : i32
    %c0_i32_1 = arith.constant 0 : i32
    return %c0_i32, %c0_i32_0 : i32, i32
  }
  func.func @transform_8(%arg0: i32) -> (i32, i32) {
    %c0_i32 = arith.constant 0 : i32
    %c0_i32_0 = arith.constant 0 : i32
    return %c0_i32, %arg0 : i32, i32
  }
}

</mosaic_0001>

<llo_original>
// kernel: tpu_custom_call.1
$region0: #{tpu_custom_call.1}
  #allocation0 [shape = 'u32[]', space=smem, size = 0x4, offset = 0x4, fixed_abs, tag = 'smem constant byte address 0x4 - core index']
  #allocation1 [shape = 'u32[144,128]{1,0:T(1,128)}', space=vmem, size = 0x12000, scoped, tag = 'internal scratch']
  %s0 = inlined_call_operand.vmem [shape: bf16[4,4096], index: 0, kind: input, shape index: {}]
  %s1 = inlined_call_operand.vmem [shape: bf16[128,4], index: 1, kind: input, shape index: {}]
  %s2 = inlined_call_operand.vmem [shape: bf16[128,128], index: 2, kind: input, shape index: {}]
  %s3 = inlined_call_operand.vmem [shape: f32[128,1], index: 3, kind: input, shape index: {}]
  %s4 = inlined_call_operand.vmem [shape: bf16[128,128], index: 4, kind: input, shape index: {}]
  %s5 = inlined_call_operand.vmem [shape: f32[128,1], index: 5, kind: input, shape index: {}]
  %s6 = inlined_call_operand.vmem [shape: bf16[8,128], index: 6, kind: input, shape index: {}]
  %s7 = inlined_call_operand.vmem [shape: f32[8,1], index: 7, kind: input, shape index: {}]
  %s8 = inlined_call_operand.hbm [shape: f32[1,4096], index: 8, kind: output, shape index: {}]
  %s9 = sld [smem:[#allocation0]]
  $region65: #{tpu_custom_call.1} parent=0
    _
  %s11 = ssub.s32 1, %s9
  %s12 = scalar_select 0, %s11, %s9
  $region1: #{tpu_custom_call.1} parent=0
    #allocation2 [shape = 'u8[8192]{0}', space=vmem, size = 0x2000, scoped, tag = 'output window, operand 0']
    #allocation3 [shape = 's32[2]{0}', space=sflag, size = 0x8, scoped, tag = 'scoped memory for tpu_custom_call.1']
    %13 = vsyncpa [#allocation3], 0
    %s14 = scalar_lea.sflag [#allocation3], 1
    %15 = vsyncpa %s14, 0
    loop: start=0, step=1, limit=6
    $region2: #{tpu_custom_call.1} parent=1 // loop_pre_header
      _
    $region3: #{tpu_custom_call.1} parent=1 // loop_header
      %s17 = sphi 0, %s21
      %p18 = scmp.ge.s32.totalorder %s17, 6
      %s27 = sphi 0, %s29
      %s30 = sphi 0, %s27
      %s31 = sphi 0, %s30
      %s47 = sphi 0, %s31
      %s51 = sphi 0, %s51
      %s53 = sphi 0, %s51
      %s54 = sphi 0, %s53
      %s68 = sphi 0, %s54
      %s72 = sphi 0, %s72
      %s74 = sphi 0, %s72
      %s75 = sphi 0, %s74
      %s89 = sphi 0, %s75
      %s93 = sphi 0, %s93
      %s95 = sphi 0, %s93
      %s96 = sphi 0, %s95
      %s110 = sphi 0, %s96
      %s114 = sphi 0, %s114
      %s116 = sphi 0, %s114
      %s117 = sphi 0, %s116
      %s131 = sphi 0, %s117
      %s135 = sphi 0, %s135
      %s137 = sphi 0, %s135
      %s138 = sphi 0, %s137
      %s152 = sphi 0, %s138
      %s156 = sphi 0, %s156
      %s158 = sphi 0, %s156
      %s159 = sphi 0, %s158
      %s173 = sphi 0, %s159
      %s177 = sphi 0, %s177
      %s179 = sphi 0, %s177
      %s180 = sphi 0, %s179
      %s194 = sphi 0, %s180
      %s200 = sphi 0, %s202
      %s203 = sphi 0, %s200
      %s204 = sphi 0, %s203
      %s220 = sphi 0, %s204
    $region4: #{tpu_custom_call.1} parent=1 // loop_header_branch
      %20 = sbr.rel (%p18) target = $region8
    $region5: #{tpu_custom_call.1} parent=1 // loop_body
      %s22 = ssub.s32 %s17, 1
      %s23 = ssub.s32 %s17, 2
      %s24 = sadd.s32 %s17, 1
      %s25 = ssub.s32 %s17, %s24
      %p26 = scmp.eq.s32.totalorder %s25, 0
      %s28 = sadd.s32 %s27, 1
      %s29 = scalar_select %p26, %s27, %s28
      %p32 = pneg %p26
      %p33 = scmp.eq.s32.totalorder %s17, 3
      %p34 = por %p32, %p33
      %p35 = scmp.ne.s32.totalorder %s27, %s30
      %p36 = scmp.eq.s32.totalorder %s17, 0
      %p37 = por %p35, %p36
      %p38 = scmp.ne.s32.totalorder %s27, %s30
      %p39 = scmp.eq.s32.totalorder %s22, 3
      %p40 = por %p38, %p39
      %p41 = scmp.ne.s32.totalorder %s30, %s31
      %p42 = scmp.eq.s32.totalorder %s22, 0
      %p43 = por %p41, %p42
      %p44 = scmp.ne.s32.totalorder %s30, %s31
      %p45 = scmp.eq.s32.totalorder %s23, 3
      %p46 = por %p44, %p45
      %p48 = scmp.ne.s32.totalorder %s31, %s47
      %p49 = scmp.eq.s32.totalorder %s23, 0
      %p50 = por %p48, %p49
      %s52 = sadd.s32 %s51, 1
      %p55 = scmp.eq.s32.totalorder %s17, 3
      %p56 = scmp.ne.s32.totalorder %s51, %s53
      %p57 = scmp.eq.s32.totalorder %s17, 0
      %p58 = por %p56, %p57
      %p59 = scmp.ne.s32.totalorder %s51, %s53
      %p60 = scmp.eq.s32.totalorder %s22, 3
      %p61 = por %p59, %p60
      %p62 = scmp.ne.s32.totalorder %s53, %s54
      %p63 = scmp.eq.s32.totalorder %s22, 0
      %p64 = por %p62, %p63
      %p65 = scmp.ne.s32.totalorder %s53, %s54
      %p66 = scmp.eq.s32.totalorder %s23, 3
      %p67 = por %p65, %p66
      %p69 = scmp.ne.s32.totalorder %s54, %s68
      %p70 = scmp.eq.s32.totalorder %s23, 0
      %p71 = por %p69, %p70
      %s73 = sadd.s32 %s72, 1
      %p76 = scmp.eq.s32.totalorder %s17, 3
      %p77 = scmp.ne.s32.totalorder %s72, %s74
      %p78 = scmp.eq.s32.totalorder %s17, 0
      %p79 = por %p77, %p78
      %p80 = scmp.ne.s32.totalorder %s72, %s74
      %p81 = scmp.eq.s32.totalorder %s22, 3
      %p82 = por %p80, %p81
      %p83 = scmp.ne.s32.totalorder %s74, %s75
      %p84 = scmp.eq.s32.totalorder %s22, 0
      %p85 = por %p83, %p84
      %p86 = scmp.ne.s32.totalorder %s74, %s75
      %p87 = scmp.eq.s32.totalorder %s23, 3
      %p88 = por %p86, %p87
      %p90 = scmp.ne.s32.totalorder %s75, %s89
      %p91 = scmp.eq.s32.totalorder %s23, 0
      %p92 = por %p90, %p91
      %s94 = sadd.s32 %s93, 1
      %p97 = scmp.eq.s32.totalorder %s17, 3
      %p98 = scmp.ne.s32.totalorder %s93, %s95
      %p99 = scmp.eq.s32.totalorder %s17, 0
      %p100 = por %p98, %p99
      %p101 = scmp.ne.s32.totalorder %s93, %s95
      %p102 = scmp.eq.s32.totalorder %s22, 3
      %p103 = por %p101, %p102
      %p104 = scmp.ne.s32.totalorder %s95, %s96
      %p105 = scmp.eq.s32.totalorder %s22, 0
      %p106 = por %p104, %p105
      %p107 = scmp.ne.s32.totalorder %s95, %s96
      %p108 = scmp.eq.s32.totalorder %s23, 3
      %p109 = por %p107, %p108
      %p111 = scmp.ne.s32.totalorder %s96, %s110
      %p112 = scmp.eq.s32.totalorder %s23, 0
      %p113 = por %p111, %p112
      %s115 = sadd.s32 %s114, 1
      %p118 = scmp.eq.s32.totalorder %s17, 3
      %p119 = scmp.ne.s32.totalorder %s114, %s116
      %p120 = scmp.eq.s32.totalorder %s17, 0
      %p121 = por %p119, %p120
      %p122 = scmp.ne.s32.totalorder %s114, %s116
      %p123 = scmp.eq.s32.totalorder %s22, 3
      %p124 = por %p122, %p123
      %p125 = scmp.ne.s32.totalorder %s116, %s117
      %p126 = scmp.eq.s32.totalorder %s22, 0
      %p127 = por %p125, %p126
      %p128 = scmp.ne.s32.totalorder %s116, %s117
      %p129 = scmp.eq.s32.totalorder %s23, 3
      %p130 = por %p128, %p129
      %p132 = scmp.ne.s32.totalorder %s117, %s131
      %p133 = scmp.eq.s32.totalorder %s23, 0
      %p134 = por %p132, %p133
      %s136 = sadd.s32 %s135, 1
      %p139 = scmp.eq.s32.totalorder %s17, 3
      %p140 = scmp.ne.s32.totalorder %s135, %s137
      %p141 = scmp.eq.s32.totalorder %s17, 0
      %p142 = por %p140, %p141
      %p143 = scmp.ne.s32.totalorder %s135, %s137
      %p144 = scmp.eq.s32.totalorder %s22, 3
      %p145 = por %p143, %p144
      %p146 = scmp.ne.s32.totalorder %s137, %s138
      %p147 = scmp.eq.s32.totalorder %s22, 0
      %p148 = por %p146, %p147
      %p149 = scmp.ne.s32.totalorder %s137, %s138
      %p150 = scmp.eq.s32.totalorder %s23, 3
      %p151 = por %p149, %p150
      %p153 = scmp.ne.s32.totalorder %s138, %s152
      %p154 = scmp.eq.s32.totalorder %s23, 0
      %p155 = por %p153, %p154
      %s157 = sadd.s32 %s156, 1
      %p160 = scmp.eq.s32.totalorder %s17, 3
      %p161 = scmp.ne.s32.totalorder %s156, %s158
      %p162 = scmp.eq.s32.totalorder %s17, 0
      %p163 = por %p161, %p162
      %p164 = scmp.ne.s32.totalorder %s156, %s158
      %p165 = scmp.eq.s32.totalorder %s22, 3
      %p166 = por %p164, %p165
      %p167 = scmp.ne.s32.totalorder %s158, %s159
      %p168 = scmp.eq.s32.totalorder %s22, 0
      %p169 = por %p167, %p168
      %p170 = scmp.ne.s32.totalorder %s158, %s159
      %p171 = scmp.eq.s32.totalorder %s23, 3
      %p172 = por %p170, %p171
      %p174 = scmp.ne.s32.totalorder %s159, %s173
      %p175 = scmp.eq.s32.totalorder %s23, 0
      %p176 = por %p174, %p175
      %s178 = sadd.s32 %s177, 1
      %p181 = scmp.eq.s32.totalorder %s17, 3
      %p182 = scmp.ne.s32.totalorder %s177, %s179
      %p183 = scmp.eq.s32.totalorder %s17, 0
      %p184 = por %p182, %p183
      %p185 = scmp.ne.s32.totalorder %s177, %s179
      %p186 = scmp.eq.s32.totalorder %s22, 3
      %p187 = por %p185, %p186
      %p188 = scmp.ne.s32.totalorder %s179, %s180
      %p189 = scmp.eq.s32.totalorder %s22, 0
      %p190 = por %p188, %p189
      %p191 = scmp.ne.s32.totalorder %s179, %s180
      %p192 = scmp.eq.s32.totalorder %s23, 3
      %p193 = por %p191, %p192
      %p195 = scmp.ne.s32.totalorder %s180, %s194
      %p196 = scmp.eq.s32.totalorder %s23, 0
      %p197 = por %p195, %p196
      %s198 = ssub.s32 %s17, %s24
      %p199 = scmp.eq.s32.totalorder %s198, 0
      %s201 = sadd.s32 %s200, 1
      %s202 = scalar_select %p199, %s200, %s201
      %p205 = pneg %p199
      %p206 = scmp.eq.s32.totalorder %s17, 3
      %p207 = por %p205, %p206
      %p208 = scmp.ne.s32.totalorder %s200, %s203
      %p209 = scmp.eq.s32.totalorder %s17, 0
      %p210 = por %p208, %p209
      %p211 = scmp.ne.s32.totalorder %s200, %s203
      %p212 = scmp.eq.s32.totalorder %s22, 3
      %p213 = por %p211, %p212
      %p214 = scmp.ne.s32.totalorder %s203, %s204
      %p215 = scmp.eq.s32.totalorder %s22, 0
      %p216 = por %p214, %p215
      %p217 = scmp.ne.s32.totalorder %s203, %s204
      %p218 = scmp.eq.s32.totalorder %s23, 3
      %p219 = por %p217, %p218
      %p221 = scmp.ne.s32.totalorder %s204, %s220
      %p222 = scmp.eq.s32.totalorder %s23, 0
      %p223 = por %p221, %p222
      %p224 = scmp.le.s32.totalorder 1, %s17
      %p225 = scmp.lt.s32.totalorder %s17, 5
      %p226 = pnand %p224, %p225
      %p227 = pneg %p226
      // Predicated region
      $region9: #{tpu_custom_call.1} parent=5 // pred_check
        _
      $region10: #{tpu_custom_call.1} parent=5 // pred_check_branch
        %229 = sbr.rel (%p226) target = $region12
      $region11: #{tpu_custom_call.1} parent=5 // pred_region
        %s230 = ssub.s32 %s17, 1
        // Predicated region
        $region13: #{tpu_custom_call.1} parent=11 // pred_check
          %p231 = pneg %p64
        $region14: #{tpu_custom_call.1} parent=11 // pred_check_branch
          %233 = sbr.rel (%p231) target = $region16
        $region15: #{tpu_custom_call.1} parent=11 // pred_region
          _
        $region16: #{tpu_custom_call.1} parent=11 // pred_fallthru
          _
        // Predicated region
        $region17: #{tpu_custom_call.1} parent=11 // pred_check
          %p234 = pneg %p85
        $region18: #{tpu_custom_call.1} parent=11 // pred_check_branch
          %236 = sbr.rel (%p234) target = $region20
        $region19: #{tpu_custom_call.1} parent=11 // pred_region
          _
        $region20: #{tpu_custom_call.1} parent=11 // pred_fallthru
          _
        // Predicated region
        $region21: #{tpu_custom_call.1} parent=11 // pred_check
          %p237 = pneg %p106
        $region22: #{tpu_custom_call.1} parent=11 // pred_check_branch
          %239 = sbr.rel (%p237) target = $region24
        $region23: #{tpu_custom_call.1} parent=11 // pred_region
          _
        $region24: #{tpu_custom_call.1} parent=11 // pred_fallthru
          _
        // Predicated region
        $region25: #{tpu_custom_call.1} parent=11 // pred_check
          %p240 = pneg %p127
        $region26: #{tpu_custom_call.1} parent=11 // pred_check_branch
          %242 = sbr.rel (%p240) target = $region28
        $region27: #{tpu_custom_call.1} parent=11 // pred_region
          _
        $region28: #{tpu_custom_call.1} parent=11 // pred_fallthru
          _
        // Predicated region
        $region29: #{tpu_custom_call.1} parent=11 // pred_check
          %p243 = pneg %p148
        $region30: #{tpu_custom_call.1} parent=11 // pred_check_branch
          %245 = sbr.rel (%p243) target = $region32
        $region31: #{tpu_custom_call.1} parent=11 // pred_region
          _
        $region32: #{tpu_custom_call.1} parent=11 // pred_fallthru
          _
        // Predicated region
        $region33: #{tpu_custom_call.1} parent=11 // pred_check
          %p246 = pneg %p169
        $region34: #{tpu_custom_call.1} parent=11 // pred_check_branch
          %248 = sbr.rel (%p246) target = $region36
        $region35: #{tpu_custom_call.1} parent=11 // pred_region
          _
        $region36: #{tpu_custom_call.1} parent=11 // pred_fallthru
          _
        // Predicated region
        $region37: #{tpu_custom_call.1} parent=11 // pred_check
          %p249 = pneg %p190
        $region38: #{tpu_custom_call.1} parent=11 // pred_check_branch
          %251 = sbr.rel (%p249) target = $region40
        $region39: #{tpu_custom_call.1} parent=11 // pred_region
          _
        $region40: #{tpu_custom_call.1} parent=11 // pred_fallthru
          _
      $region12: #{tpu_custom_call.1} parent=5 // pred_fallthru
        _
      %p252 = scmp.lt.s32.totalorder %s17, 4
      // Predicated region
      $region41: #{tpu_custom_call.1} parent=5 // pred_check
        %p253 = pneg %p252
      $region42: #{tpu_custom_call.1} parent=5 // pred_check_branch
        %255 = sbr.rel (%p253) target = $region44
      $region43: #{tpu_custom_call.1} parent=5 // pred_region
        // Predicated region
        $region45: #{tpu_custom_call.1} parent=43 // pred_check
          %p256 = pneg %p37
        $region46: #{tpu_custom_call.1} parent=43 // pred_check_branch
          %258 = sbr.rel (%p256) target = $region48
        $region47: #{tpu_custom_call.1} parent=43 // pred_region
          %s259 = smul.u32 8, %s17
          %p260 = scmp.lt.s32.totalorder %s259, 31
          %s261 = scalar_select %p260, %s259, 31
          %s262 = smul.addr %s261, 2
          %s263 = scalar_lea.vmem %s0, %s262
          %s264 = smul.u32 8, %s17
        $region48: #{tpu_custom_call.1} parent=43 // pred_fallthru
          _
      $region44: #{tpu_custom_call.1} parent=5 // pred_fallthru
        _
      %p265 = scmp.le.s32.totalorder 1, %s17
      %p266 = scmp.lt.s32.totalorder %s17, 5
      %p267 = pnand %p265, %p266
      %p268 = pneg %p267
      // Predicated region
      $region49: #{tpu_custom_call.1} parent=5 // pred_check
        _
      $region50: #{tpu_custom_call.1} parent=5 // pred_check_branch
        %270 = sbr.rel (%p267) target = $region52
      $region51: #{tpu_custom_call.1} parent=5 // pred_region
        %s271 = ssub.s32 %s17, 1
        %s272 = smul.u32 8, %s22
        %p273 = scmp.lt.s32.totalorder %s272, 31
        %s274 = scalar_select %p273, %s272, 31
        %s275 = smul.addr %s274, 2
        %s276 = scalar_lea.vmem %s0, %s275
        %p277 = pneg %p43
        %p278 = pneg %p40
        %p279 = pneg %p64
        %p280 = pneg %p61
        %p281 = pneg %p85
        %p282 = pneg %p82
        %p283 = pneg %p106
        %p284 = pneg %p103
        %p285 = pneg %p127
        %p286 = pneg %p124
        %p287 = pneg %p148
        %p288 = pneg %p145
        %p289 = pneg %p169
        %p290 = pneg %p166
        %p291 = pneg %p190
        %p292 = pneg %p187
        %p293 = pneg %p216
        %p294 = pneg %p213
        %s295 = sand.u32 %s203, 1
        %s296 = scalar_lea.sflag [#allocation3], %s295
        %s297 = sand.u32 %s203, 1
        %s298 = smul.addr %s297, 8
        %s299 = scalar_lea.vmem [#allocation2], %s298
        %s300 = smul.u32 8, %s22
        %p301 = scmp.lt.s32.totalorder %s300, 31
        %s302 = scalar_select %p301, %s300, 31
        %s303 = smul.addr %s302, 2
        %s304 = scalar_lea.vmem %s0, %s303
        %s305 = smul.u32 8, %s22
        %s306 = smul.u32 8, %s22
        %v308 = vld [vmem:[%s304] sm:$0xff]
        %v309 = vld [vmem:[%s304 + $0x8] sm:$0xff]
        %v310 = vld [vmem:[%s1] sm:$0xf]
        %v311 = vld [vmem:[%s1 + $0x4] sm:$0xf]
        %v312 = vld [vmem:[%s1 + $0x8] sm:$0xf]
        %v313 = vld [vmem:[%s1 + $0xc] sm:$0xf]
        %v314 = vld [vmem:[%s1 + $0x10] sm:$0xf]
        %v315 = vld [vmem:[%s1 + $0x14] sm:$0xf]
        %v316 = vld [vmem:[%s1 + $0x18] sm:$0xf]
        %v317 = vld [vmem:[%s1 + $0x1c] sm:$0xf]
        %v318 = vld [vmem:[%s1 + $0x20] sm:$0xf]
        %v319 = vld [vmem:[%s1 + $0x24] sm:$0xf]
        %v320 = vld [vmem:[%s1 + $0x28] sm:$0xf]
        %v321 = vld [vmem:[%s1 + $0x2c] sm:$0xf]
        %v322 = vld [vmem:[%s1 + $0x30] sm:$0xf]
        %v323 = vld [vmem:[%s1 + $0x34] sm:$0xf]
        %v324 = vld [vmem:[%s1 + $0x38] sm:$0xf]
        %v325 = vld [vmem:[%s1 + $0x3c] sm:$0xf]
        %v342 = vunpack.c.l.b16 %v310
        %v343 = vunpack.c.l.b16 %v311
        %v344 = vunpack.c.l.b16 %v312
        %v345 = vunpack.c.l.b16 %v313
        %v346 = vunpack.c.l.b16 %v314
        %v347 = vunpack.c.l.b16 %v315
        %v348 = vunpack.c.l.b16 %v316
        %v349 = vunpack.c.l.b16 %v317
        %v350 = vunpack.c.l.b16 %v318
        %v351 = vunpack.c.l.b16 %v319
        %v352 = vunpack.c.l.b16 %v320
        %v353 = vunpack.c.l.b16 %v321
        %v354 = vunpack.c.l.b16 %v322
        %v355 = vunpack.c.l.b16 %v323
        %v356 = vunpack.c.l.b16 %v324
        %v357 = vunpack.c.l.b16 %v325
        %v358 = vpack.c.b16 %v343, %v342
        %v359 = vpack.c.b16 %v345, %v344
        %v360 = vpack.c.b16 %v347, %v346
        %v361 = vpack.c.b16 %v349, %v348
        %v362 = vpack.c.b16 %v351, %v350
        %v363 = vpack.c.b16 %v353, %v352
        %v364 = vpack.c.b16 %v355, %v354
        %v365 = vpack.c.b16 %v357, %v356
        %v368 = vcombine.high %v308, %v308
        %v370 = vunpack.c.l.s4 1983009808
        %v371 = vunpack.c.0.s8 %v370
        %v372 = vlaneseq
        %v373 = vshrl.u32 %v372, 7
        %v374 = vsub.s32 %v371, %v373
        %v375 = vrot.slane %v308, %v374
        %v377 = vunpack.c.l.s4 1983009808
        %v378 = vunpack.c.0.s8 %v377
        %v379 = vlaneseq
        %v380 = vshrl.u32 %v379, 7
        %v381 = vsub.s32 %v378, %v380
        %v382 = vrot.slane %v368, %v381
        %v383 = vcombine.high %v375, %v375
        %v384 = vcombine.high %v382, %v382
        %v385 = vcombine.high %v309, %v309
        %v387 = vunpack.c.l.s4 1983009808
        %v388 = vunpack.c.0.s8 %v387
        %v389 = vlaneseq
        %v390 = vshrl.u32 %v389, 7
        %v391 = vsub.s32 %v388, %v390
        %v392 = vrot.slane %v309, %v391
        %v394 = vunpack.c.l.s4 1983009808
        %v395 = vunpack.c.0.s8 %v394
        %v396 = vlaneseq
        %v397 = vshrl.u32 %v396, 7
        %v398 = vsub.s32 %v395, %v397
        %v399 = vrot.slane %v385, %v398
        %v400 = vcombine.high %v392, %v392
        %v401 = vcombine.high %v399, %v399
        %vm402 = vcmask 31744
        %v404 = vsel %vm402, %v358, 0
        %v407 = vsel %vm402, %v359, 0
        %v410 = vsel %vm402, %v360, 0
        %v413 = vsel %vm402, %v361, 0
        %v416 = vsel %vm402, %v362, 0
        %v419 = vsel %vm402, %v363, 0
        %v422 = vsel %vm402, %v364, 0
        %v425 = vsel %vm402, %v365, 0
        %vm427 = vcmask 1041408
        %v429 = vsel %vm427, %v375, 0
        %v432 = vsel %vm427, %v383, 0
        %v435 = vsel %vm427, %v382, 0
        %v438 = vsel %vm427, %v384, 0
        %v441 = vsel %vm427, %v392, 0
        %v444 = vsel %vm427, %v400, 0
        %v447 = vsel %vm427, %v399, 0
        %v450 = vsel %vm427, %v401, 0
        %452 = vmatprep.subr.bf16.mxu0 0
        %453 = vmatpush1.bf16.msra.mxu0 0
        %454 = vmatprep.subr.bf16.mxu0 0
        %455 = vmatpush1.bf16.msra.mxu0 0
        %456 = vmatprep.subr.bf16.mxu0 0
        %457 = vmatpush1.bf16.msra.mxu0 0
        %458 = vmatprep.subr.bf16.mxu0 0
        %459 = vmatpush1.bf16.msra.mxu0 0
        %460 = vmatprep.subr.bf16.mxu0 0
        %461 = vmatpush1.bf16.msra.mxu0 0
        %462 = vmatprep.subr.bf16.mxu0 0
        %463 = vmatpush1.bf16.msra.mxu0 0
        %464 = vmatprep.subr.bf16.mxu0 0
        %465 = vmatpush1.bf16.msra.mxu0 0
        %466 = vmatprep.subr.bf16.mxu0 %v432
        %467 = vmatpush1.bf16.msra.mxu0 %v429
        %468 = vmatprep.subr.bf16.mxu0 0
        %469 = vmatpush2.bf16.msra.mxu0 0
        %470 = vmatprep.subr.bf16.mxu0 0
        %471 = vmatpush2.bf16.msra.mxu0 0
        %472 = vmatprep.subr.bf16.mxu0 0
        %473 = vmatpush2.bf16.msra.mxu0 0
        %474 = vmatprep.subr.bf16.mxu0 0
        %475 = vmatpush2.bf16.msra.mxu0 0
        %476 = vmatprep.subr.bf16.mxu0 0
        %477 = vmatpush2.bf16.msra.mxu0 0
        %478 = vmatprep.subr.bf16.mxu0 0
        %479 = vmatpush2.bf16.msra.mxu0 0
        %480 = vmatprep.subr.bf16.mxu0 0
        %481 = vmatpush2.bf16.msra.mxu0 0
        %482 = vmatprep.subr.bf16.mxu0 0
        %483 = vmatpush2.bf16.msra.mxu0 0
        %484 = vmatprep.mubr.bf16.mxu0 0
        %485 = vmatmul.mubr.bf16.gmra.mxu0 %v404
        %v486 = vpop.f32.mrf.mxu0
        %v487 = vadd.f32 0.0, %v486
        %v488 = vpop.f32.mrf.mxu0
        %v489 = vadd.f32 0.0, %v488
        %v490 = vpop.f32.mrf.mxu0
        %v491 = vadd.f32 0.0, %v490
        %v492 = vpop.f32.mrf.mxu0
        %v493 = vadd.f32 0.0, %v492
        %494 = vmatprep.mubr.bf16.mxu0 0
        %495 = vmatmul.mubr.bf16.gmra.mxu0 %v407
        %v496 = vpop.f32.mrf.mxu0
        %v497 = vadd.f32 0.0, %v496
        %v498 = vpop.f32.mrf.mxu0
        %v499 = vadd.f32 0.0, %v498
        %v500 = vpop.f32.mrf.mxu0
        %v501 = vadd.f32 0.0, %v500
        %v502 = vpop.f32.mrf.mxu0
        %v503 = vadd.f32 0.0, %v502
        %504 = vmatprep.mubr.bf16.mxu0 0
        %505 = vmatmul.mubr.bf16.gmra.mxu0 %v410
        %v506 = vpop.f32.mrf.mxu0
        %v507 = vadd.f32 0.0, %v506
        %v508 = vpop.f32.mrf.mxu0
        %v509 = vadd.f32 0.0, %v508
        %v510 = vpop.f32.mrf.mxu0
        %v511 = vadd.f32 0.0, %v510
        %v512 = vpop.f32.mrf.mxu0
        %v513 = vadd.f32 0.0, %v512
        %514 = vmatprep.mubr.bf16.mxu0 0
        %515 = vmatmul.mubr.bf16.gmra.mxu0 %v413
        %v516 = vpop.f32.mrf.mxu0
        %v517 = vadd.f32 0.0, %v516
        %v518 = vpop.f32.mrf.mxu0
        %v519 = vadd.f32 0.0, %v518
        %v520 = vpop.f32.mrf.mxu0
        %v521 = vadd.f32 0.0, %v520
        %v522 = vpop.f32.mrf.mxu0
        %v523 = vadd.f32 0.0, %v522
        %524 = vmatprep.mubr.bf16.mxu0 0
        %525 = vmatmul.mubr.bf16.gmra.mxu0 %v416
        %v526 = vpop.f32.mrf.mxu0
        %v527 = vadd.f32 0.0, %v526
        %v528 = vpop.f32.mrf.mxu0
        %v529 = vadd.f32 0.0, %v528
        %v530 = vpop.f32.mrf.mxu0
        %v531 = vadd.f32 0.0, %v530
        %v532 = vpop.f32.mrf.mxu0
        %v533 = vadd.f32 0.0, %v532
        %534 = vmatprep.mubr.bf16.mxu0 0
        %535 = vmatmul.mubr.bf16.gmra.mxu0 %v419
        %v536 = vpop.f32.mrf.mxu0
        %v537 = vadd.f32 0.0, %v536
        %v538 = vpop.f32.mrf.mxu0
        %v539 = vadd.f32 0.0, %v538
        %v540 = vpop.f32.mrf.mxu0
        %v541 = vadd.f32 0.0, %v540
        %v542 = vpop.f32.mrf.mxu0
        %v543 = vadd.f32 0.0, %v542
        %544 = vmatprep.mubr.bf16.mxu0 0
        %545 = vmatmul.mubr.bf16.gmra.mxu0 %v422
        %v546 = vpop.f32.mrf.mxu0
        %v547 = vadd.f32 0.0, %v546
        %v548 = vpop.f32.mrf.mxu0
        %v549 = vadd.f32 0.0, %v548
        %v550 = vpop.f32.mrf.mxu0
        %v551 = vadd.f32 0.0, %v550
        %v552 = vpop.f32.mrf.mxu0
        %v553 = vadd.f32 0.0, %v552
        %554 = vmatprep.mubr.bf16.mxu0 0
        %555 = vmatmul.mubr.bf16.gmra.mxu0 %v425
        %v556 = vpop.f32.mrf.mxu0
        %v557 = vadd.f32 0.0, %v556
        %v558 = vpop.f32.mrf.mxu0
        %v559 = vadd.f32 0.0, %v558
        %v560 = vpop.f32.mrf.mxu0
        %v561 = vadd.f32 0.0, %v560
        %v562 = vpop.f32.mrf.mxu0
        %v563 = vadd.f32 0.0, %v562
        %564 = vdwg.mxu0
        %565 = vmatprep.subr.bf16.mxu0 0
        %566 = vmatpush1.bf16.msra.mxu0 0
        %567 = vmatprep.subr.bf16.mxu0 0
        %568 = vmatpush1.bf16.msra.mxu0 0
        %569 = vmatprep.subr.bf16.mxu0 0
        %570 = vmatpush1.bf16.msra.mxu0 0
        %571 = vmatprep.subr.bf16.mxu0 0
        %572 = vmatpush1.bf16.msra.mxu0 0
        %573 = vmatprep.subr.bf16.mxu0 0
        %574 = vmatpush1.bf16.msra.mxu0 0
        %575 = vmatprep.subr.bf16.mxu0 0
        %576 = vmatpush1.bf16.msra.mxu0 0
        %577 = vmatprep.subr.bf16.mxu0 0
        %578 = vmatpush1.bf16.msra.mxu0 0
        %579 = vmatprep.subr.bf16.mxu0 %v438
        %580 = vmatpush1.bf16.msra.mxu0 %v435
        %581 = vmatprep.subr.bf16.mxu0 0
        %582 = vmatpush2.bf16.msra.mxu0 0
        %583 = vmatprep.subr.bf16.mxu0 0
        %584 = vmatpush2.bf16.msra.mxu0 0
        %585 = vmatprep.subr.bf16.mxu0 0
        %586 = vmatpush2.bf16.msra.mxu0 0
        %587 = vmatprep.subr.bf16.mxu0 0
        %588 = vmatpush2.bf16.msra.mxu0 0
        %589 = vmatprep.subr.bf16.mxu0 0
        %590 = vmatpush2.bf16.msra.mxu0 0
        %591 = vmatprep.subr.bf16.mxu0 0
        %592 = vmatpush2.bf16.msra.mxu0 0
        %593 = vmatprep.subr.bf16.mxu0 0
        %594 = vmatpush2.bf16.msra.mxu0 0
        %595 = vmatprep.subr.bf16.mxu0 0
        %596 = vmatpush2.bf16.msra.mxu0 0
        %597 = vmatprep.mubr.bf16.mxu0 0
        %598 = vmatmul.mubr.bf16.gmra.mxu0 %v404
        %v599 = vpop.f32.mrf.mxu0
        %v600 = vadd.f32 0.0, %v599
        %v601 = vpop.f32.mrf.mxu0
        %v602 = vadd.f32 0.0, %v601
        %v603 = vpop.f32.mrf.mxu0
        %v604 = vadd.f32 0.0, %v603
        %v605 = vpop.f32.mrf.mxu0
        %v606 = vadd.f32 0.0, %v605
        %607 = vmatprep.mubr.bf16.mxu0 0
        %608 = vmatmul.mubr.bf16.gmra.mxu0 %v407
        %v609 = vpop.f32.mrf.mxu0
        %v610 = vadd.f32 0.0, %v609
        %v611 = vpop.f32.mrf.mxu0
        %v612 = vadd.f32 0.0, %v611
        %v613 = vpop.f32.mrf.mxu0
        %v614 = vadd.f32 0.0, %v613
        %v615 = vpop.f32.mrf.mxu0
        %v616 = vadd.f32 0.0, %v615
        %617 = vmatprep.mubr.bf16.mxu0 0
        %618 = vmatmul.mubr.bf16.gmra.mxu0 %v410
        %v619 = vpop.f32.mrf.mxu0
        %v620 = vadd.f32 0.0, %v619
        %v621 = vpop.f32.mrf.mxu0
        %v622 = vadd.f32 0.0, %v621
        %v623 = vpop.f32.mrf.mxu0
        %v624 = vadd.f32 0.0, %v623
        %v625 = vpop.f32.mrf.mxu0
        %v626 = vadd.f32 0.0, %v625
        %627 = vmatprep.mubr.bf16.mxu0 0
        %628 = vmatmul.mubr.bf16.gmra.mxu0 %v413
        %v629 = vpop.f32.mrf.mxu0
        %v630 = vadd.f32 0.0, %v629
        %v631 = vpop.f32.mrf.mxu0
        %v632 = vadd.f32 0.0, %v631
        %v633 = vpop.f32.mrf.mxu0
        %v634 = vadd.f32 0.0, %v633
        %v635 = vpop.f32.mrf.mxu0
        %v636 = vadd.f32 0.0, %v635
        %637 = vmatprep.mubr.bf16.mxu0 0
        %638 = vmatmul.mubr.bf16.gmra.mxu0 %v416
        %v639 = vpop.f32.mrf.mxu0
        %v640 = vadd.f32 0.0, %v639
        %v641 = vpop.f32.mrf.mxu0
        %v642 = vadd.f32 0.0, %v641
        %v643 = vpop.f32.mrf.mxu0
        %v644 = vadd.f32 0.0, %v643
        %v645 = vpop.f32.mrf.mxu0
        %v646 = vadd.f32 0.0, %v645
        %647 = vmatprep.mubr.bf16.mxu0 0
        %648 = vmatmul.mubr.bf16.gmra.mxu0 %v419
        %v649 = vpop.f32.mrf.mxu0
        %v650 = vadd.f32 0.0, %v649
        %v651 = vpop.f32.mrf.mxu0
        %v652 = vadd.f32 0.0, %v651
        %v653 = vpop.f32.mrf.mxu0
        %v654 = vadd.f32 0.0, %v653
        %v655 = vpop.f32.mrf.mxu0
        %v656 = vadd.f32 0.0, %v655
        %657 = vmatprep.mubr.bf16.mxu0 0
        %658 = vmatmul.mubr.bf16.gmra.mxu0 %v422
        %v659 = vpop.f32.mrf.mxu0
        %v660 = vadd.f32 0.0, %v659
        %v661 = vpop.f32.mrf.mxu0
        %v662 = vadd.f32 0.0, %v661
        %v663 = vpop.f32.mrf.mxu0
        %v664 = vadd.f32 0.0, %v663
        %v665 = vpop.f32.mrf.mxu0
        %v666 = vadd.f32 0.0, %v665
        %667 = vmatprep.mubr.bf16.mxu0 0
        %668 = vmatmul.mubr.bf16.gmra.mxu0 %v425
        %v669 = vpop.f32.mrf.mxu0
        %v670 = vadd.f32 0.0, %v669
        %v671 = vpop.f32.mrf.mxu0
        %v672 = vadd.f32 0.0, %v671
        %v673 = vpop.f32.mrf.mxu0
        %v674 = vadd.f32 0.0, %v673
        %v675 = vpop.f32.mrf.mxu0
        %v676 = vadd.f32 0.0, %v675
        %677 = vdwg.mxu0
        %678 = vmatprep.subr.bf16.mxu0 0
        %679 = vmatpush1.bf16.msra.mxu0 0
        %680 = vmatprep.subr.bf16.mxu0 0
        %681 = vmatpush1.bf16.msra.mxu0 0
        %682 = vmatprep.subr.bf16.mxu0 0
        %683 = vmatpush1.bf16.msra.mxu0 0
        %684 = vmatprep.subr.bf16.mxu0 0
        %685 = vmatpush1.bf16.msra.mxu0 0
        %686 = vmatprep.subr.bf16.mxu0 0
        %687 = vmatpush1.bf16.msra.mxu0 0
        %688 = vmatprep.subr.bf16.mxu0 0
        %689 = vmatpush1.bf16.msra.mxu0 0
        %690 = vmatprep.subr.bf16.mxu0 0
        %691 = vmatpush1.bf16.msra.mxu0 0
        %692 = vmatprep.subr.bf16.mxu0 %v444
        %693 = vmatpush1.bf16.msra.mxu0 %v441
        %694 = vmatprep.subr.bf16.mxu0 0
        %695 = vmatpush2.bf16.msra.mxu0 0
        %696 = vmatprep.subr.bf16.mxu0 0
        %697 = vmatpush2.bf16.msra.mxu0 0
        %698 = vmatprep.subr.bf16.mxu0 0
        %699 = vmatpush2.bf16.msra.mxu0 0
        %700 = vmatprep.subr.bf16.mxu0 0
        %701 = vmatpush2.bf16.msra.mxu0 0
        %702 = vmatprep.subr.bf16.mxu0 0
        %703 = vmatpush2.bf16.msra.mxu0 0
        %704 = vmatprep.subr.bf16.mxu0 0
        %705 = vmatpush2.bf16.msra.mxu0 0
        %706 = vmatprep.subr.bf16.mxu0 0
        %707 = vmatpush2.bf16.msra.mxu0 0
        %708 = vmatprep.subr.bf16.mxu0 0
        %709 = vmatpush2.bf16.msra.mxu0 0
        %710 = vmatprep.mubr.bf16.mxu0 0
        %711 = vmatmul.mubr.bf16.gmra.mxu0 %v404
        %v712 = vpop.f32.mrf.mxu0
        %v713 = vadd.f32 0.0, %v712
        %v714 = vpop.f32.mrf.mxu0
        %v715 = vadd.f32 0.0, %v714
        %v716 = vpop.f32.mrf.mxu0
        %v717 = vadd.f32 0.0, %v716
        %v718 = vpop.f32.mrf.mxu0
        %v719 = vadd.f32 0.0, %v718
        %720 = vmatprep.mubr.bf16.mxu0 0
        %721 = vmatmul.mubr.bf16.gmra.mxu0 %v407
        %v722 = vpop.f32.mrf.mxu0
        %v723 = vadd.f32 0.0, %v722
        %v724 = vpop.f32.mrf.mxu0
        %v725 = vadd.f32 0.0, %v724
        %v726 = vpop.f32.mrf.mxu0
        %v727 = vadd.f32 0.0, %v726
        %v728 = vpop.f32.mrf.mxu0
        %v729 = vadd.f32 0.0, %v728
        %730 = vmatprep.mubr.bf16.mxu0 0
        %731 = vmatmul.mubr.bf16.gmra.mxu0 %v410
        %v732 = vpop.f32.mrf.mxu0
        %v733 = vadd.f32 0.0, %v732
        %v734 = vpop.f32.mrf.mxu0
        %v735 = vadd.f32 0.0, %v734
        %v736 = vpop.f32.mrf.mxu0
        %v737 = vadd.f32 0.0, %v736
        %v738 = vpop.f32.mrf.mxu0
        %v739 = vadd.f32 0.0, %v738
        %740 = vmatprep.mubr.bf16.mxu0 0
        %741 = vmatmul.mubr.bf16.gmra.mxu0 %v413
        %v742 = vpop.f32.mrf.mxu0
        %v743 = vadd.f32 0.0, %v742
        %v744 = vpop.f32.mrf.mxu0
        %v745 = vadd.f32 0.0, %v744
        %v746 = vpop.f32.mrf.mxu0
        %v747 = vadd.f32 0.0, %v746
        %v748 = vpop.f32.mrf.mxu0
        %v749 = vadd.f32 0.0, %v748
        %750 = vmatprep.mubr.bf16.mxu0 0
        %751 = vmatmul.mubr.bf16.gmra.mxu0 %v416
        %v752 = vpop.f32.mrf.mxu0
        %v753 = vadd.f32 0.0, %v752
        %v754 = vpop.f32.mrf.mxu0
        %v755 = vadd.f32 0.0, %v754
        %v756 = vpop.f32.mrf.mxu0
        %v757 = vadd.f32 0.0, %v756
        %v758 = vpop.f32.mrf.mxu0
        %v759 = vadd.f32 0.0, %v758
        %760 = vmatprep.mubr.bf16.mxu0 0
        %761 = vmatmul.mubr.bf16.gmra.mxu0 %v419
        %v762 = vpop.f32.mrf.mxu0
        %v763 = vadd.f32 0.0, %v762
        %v764 = vpop.f32.mrf.mxu0
        %v765 = vadd.f32 0.0, %v764
        %v766 = vpop.f32.mrf.mxu0
        %v767 = vadd.f32 0.0, %v766
        %v768 = vpop.f32.mrf.mxu0
        %v769 = vadd.f32 0.0, %v768
        %770 = vmatprep.mubr.bf16.mxu0 0
        %771 = vmatmul.mubr.bf16.gmra.mxu0 %v422
        %v772 = vpop.f32.mrf.mxu0
        %v773 = vadd.f32 0.0, %v772
        %v774 = vpop.f32.mrf.mxu0
        %v775 = vadd.f32 0.0, %v774
        %v776 = vpop.f32.mrf.mxu0
        %v777 = vadd.f32 0.0, %v776
        %v778 = vpop.f32.mrf.mxu0
        %v779 = vadd.f32 0.0, %v778
        %780 = vmatprep.mubr.bf16.mxu0 0
        %781 = vmatmul.mubr.bf16.gmra.mxu0 %v425
        %v782 = vpop.f32.mrf.mxu0
        %v783 = vadd.f32 0.0, %v782
        %v784 = vpop.f32.mrf.mxu0
        %v785 = vadd.f32 0.0, %v784
        %v786 = vpop.f32.mrf.mxu0
        %v787 = vadd.f32 0.0, %v786
        %v788 = vpop.f32.mrf.mxu0
        %v789 = vadd.f32 0.0, %v788
        %790 = vdwg.mxu0
        %791 = vmatprep.subr.bf16.mxu0 0
        %792 = vmatpush1.bf16.msra.mxu0 0
        %793 = vmatprep.subr.bf16.mxu0 0
        %794 = vmatpush1.bf16.msra.mxu0 0
        %795 = vmatprep.subr.bf16.mxu0 0
        %796 = vmatpush1.bf16.msra.mxu0 0
        %797 = vmatprep.subr.bf16.mxu0 0
        %798 = vmatpush1.bf16.msra.mxu0 0
        %799 = vmatprep.subr.bf16.mxu0 0
        %800 = vmatpush1.bf16.msra.mxu0 0
        %801 = vmatprep.subr.bf16.mxu0 0
        %802 = vmatpush1.bf16.msra.mxu0 0
        %803 = vmatprep.subr.bf16.mxu0 0
        %804 = vmatpush1.bf16.msra.mxu0 0
        %805 = vmatprep.subr.bf16.mxu0 %v450
        %806 = vmatpush1.bf16.msra.mxu0 %v447
        %807 = vmatprep.subr.bf16.mxu0 0
        %808 = vmatpush2.bf16.msra.mxu0 0
        %809 = vmatprep.subr.bf16.mxu0 0
        %810 = vmatpush2.bf16.msra.mxu0 0
        %811 = vmatprep.subr.bf16.mxu0 0
        %812 = vmatpush2.bf16.msra.mxu0 0
        %813 = vmatprep.subr.bf16.mxu0 0
        %814 = vmatpush2.bf16.msra.mxu0 0
        %815 = vmatprep.subr.bf16.mxu0 0
        %816 = vmatpush2.bf16.msra.mxu0 0
        %817 = vmatprep.subr.bf16.mxu0 0
        %818 = vmatpush2.bf16.msra.mxu0 0
        %819 = vmatprep.subr.bf16.mxu0 0
        %820 = vmatpush2.bf16.msra.mxu0 0
        %821 = vmatprep.subr.bf16.mxu0 0
        %822 = vmatpush2.bf16.msra.mxu0 0
        %823 = vmatprep.mubr.bf16.mxu0 0
        %824 = vmatmul.mubr.bf16.gmra.mxu0 %v404
        %v825 = vpop.f32.mrf.mxu0
        %v826 = vadd.f32 0.0, %v825
        %v827 = vpop.f32.mrf.mxu0
        %v828 = vadd.f32 0.0, %v827
        %v829 = vpop.f32.mrf.mxu0
        %v830 = vadd.f32 0.0, %v829
        %v831 = vpop.f32.mrf.mxu0
        %v832 = vadd.f32 0.0, %v831
        %833 = vmatprep.mubr.bf16.mxu0 0
        %834 = vmatmul.mubr.bf16.gmra.mxu0 %v407
        %v835 = vpop.f32.mrf.mxu0
        %v836 = vadd.f32 0.0, %v835
        %v837 = vpop.f32.mrf.mxu0
        %v838 = vadd.f32 0.0, %v837
        %v839 = vpop.f32.mrf.mxu0
        %v840 = vadd.f32 0.0, %v839
        %v841 = vpop.f32.mrf.mxu0
        %v842 = vadd.f32 0.0, %v841
        %843 = vmatprep.mubr.bf16.mxu0 0
        %844 = vmatmul.mubr.bf16.gmra.mxu0 %v410
        %v845 = vpop.f32.mrf.mxu0
        %v846 = vadd.f32 0.0, %v845
        %v847 = vpop.f32.mrf.mxu0
        %v848 = vadd.f32 0.0, %v847
        %v849 = vpop.f32.mrf.mxu0
        %v850 = vadd.f32 0.0, %v849
        %v851 = vpop.f32.mrf.mxu0
        %v852 = vadd.f32 0.0, %v851
        %853 = vmatprep.mubr.bf16.mxu0 0
        %854 = vmatmul.mubr.bf16.gmra.mxu0 %v413
        %v855 = vpop.f32.mrf.mxu0
        %v856 = vadd.f32 0.0, %v855
        %v857 = vpop.f32.mrf.mxu0
        %v858 = vadd.f32 0.0, %v857
        %v859 = vpop.f32.mrf.mxu0
        %v860 = vadd.f32 0.0, %v859
        %v861 = vpop.f32.mrf.mxu0
        %v862 = vadd.f32 0.0, %v861
        %863 = vmatprep.mubr.bf16.mxu0 0
        %864 = vmatmul.mubr.bf16.gmra.mxu0 %v416
        %v865 = vpop.f32.mrf.mxu0
        %v866 = vadd.f32 0.0, %v865
        %v867 = vpop.f32.mrf.mxu0
        %v868 = vadd.f32 0.0, %v867
        %v869 = vpop.f32.mrf.mxu0
        %v870 = vadd.f32 0.0, %v869
        %v871 = vpop.f32.mrf.mxu0
        %v872 = vadd.f32 0.0, %v871
        %873 = vmatprep.mubr.bf16.mxu0 0
        %874 = vmatmul.mubr.bf16.gmra.mxu0 %v419
        %v875 = vpop.f32.mrf.mxu0
        %v876 = vadd.f32 0.0, %v875
        %v877 = vpop.f32.mrf.mxu0
        %v878 = vadd.f32 0.0, %v877
        %v879 = vpop.f32.mrf.mxu0
        %v880 = vadd.f32 0.0, %v879
        %v881 = vpop.f32.mrf.mxu0
        %v882 = vadd.f32 0.0, %v881
        %883 = vmatprep.mubr.bf16.mxu0 0
        %884 = vmatmul.mubr.bf16.gmra.mxu0 %v422
        %v885 = vpop.f32.mrf.mxu0
        %v886 = vadd.f32 0.0, %v885
        %v887 = vpop.f32.mrf.mxu0
        %v888 = vadd.f32 0.0, %v887
        %v889 = vpop.f32.mrf.mxu0
        %v890 = vadd.f32 0.0, %v889
        %v891 = vpop.f32.mrf.mxu0
        %v892 = vadd.f32 0.0, %v891
        %893 = vmatprep.mubr.bf16.mxu0 0
        %894 = vmatmul.mubr.bf16.gmra.mxu0 %v425
        %v895 = vpop.f32.mrf.mxu0
        %v896 = vadd.f32 0.0, %v895
        %v897 = vpop.f32.mrf.mxu0
        %v898 = vadd.f32 0.0, %v897
        %v899 = vpop.f32.mrf.mxu0
        %v900 = vadd.f32 0.0, %v899
        %v901 = vpop.f32.mrf.mxu0
        %v902 = vadd.f32 0.0, %v901
        %903 = vdwg.mxu0
        %v904 = vmax.f32 %v487, 0.0
        %v905 = vmax.f32 %v489, 0.0
        %v906 = vmax.f32 %v600, 0.0
        %v907 = vmax.f32 %v602, 0.0
        %v908 = vmax.f32 %v713, 0.0
        %v909 = vmax.f32 %v715, 0.0
        %v910 = vmax.f32 %v826, 0.0
        %v911 = vmax.f32 %v828, 0.0
        %v912 = vmax.f32 %v491, 0.0
        %v913 = vmax.f32 %v493, 0.0
        %v914 = vmax.f32 %v604, 0.0
        %v915 = vmax.f32 %v606, 0.0
        %v916 = vmax.f32 %v717, 0.0
        %v917 = vmax.f32 %v719, 0.0
        %v918 = vmax.f32 %v830, 0.0
        %v919 = vmax.f32 %v832, 0.0
        %v920 = vmax.f32 %v497, 0.0
        %v921 = vmax.f32 %v499, 0.0
        %v922 = vmax.f32 %v610, 0.0
        %v923 = vmax.f32 %v612, 0.0
        %v924 = vmax.f32 %v723, 0.0
        %v925 = vmax.f32 %v725, 0.0
        %v926 = vmax.f32 %v836, 0.0
        %v927 = vmax.f32 %v838, 0.0
        %v928 = vmax.f32 %v501, 0.0
        %v929 = vmax.f32 %v503, 0.0
        %v930 = vmax.f32 %v614, 0.0
        %v931 = vmax.f32 %v616, 0.0
        %v932 = vmax.f32 %v727, 0.0
        %v933 = vmax.f32 %v729, 0.0
        %v934 = vmax.f32 %v840, 0.0
        %v935 = vmax.f32 %v842, 0.0
        %v936 = vmax.f32 %v507, 0.0
        %v937 = vmax.f32 %v509, 0.0
        %v938 = vmax.f32 %v620, 0.0
        %v939 = vmax.f32 %v622, 0.0
        %v940 = vmax.f32 %v733, 0.0
        %v941 = vmax.f32 %v735, 0.0
        %v942 = vmax.f32 %v846, 0.0
        %v943 = vmax.f32 %v848, 0.0
        %v944 = vmax.f32 %v511, 0.0
        %v945 = vmax.f32 %v513, 0.0
        %v946 = vmax.f32 %v624, 0.0
        %v947 = vmax.f32 %v626, 0.0
        %v948 = vmax.f32 %v737, 0.0
        %v949 = vmax.f32 %v739, 0.0
        %v950 = vmax.f32 %v850, 0.0
        %v951 = vmax.f32 %v852, 0.0
        %v952 = vmax.f32 %v517, 0.0
        %v953 = vmax.f32 %v519, 0.0
        %v954 = vmax.f32 %v630, 0.0
        %v955 = vmax.f32 %v632, 0.0
        %v956 = vmax.f32 %v743, 0.0
        %v957 = vmax.f32 %v745, 0.0
        %v958 = vmax.f32 %v856, 0.0
        %v959 = vmax.f32 %v858, 0.0
        %v960 = vmax.f32 %v521, 0.0
        %v961 = vmax.f32 %v523, 0.0
        %v962 = vmax.f32 %v634, 0.0
        %v963 = vmax.f32 %v636, 0.0
        %v964 = vmax.f32 %v747, 0.0
        %v965 = vmax.f32 %v749, 0.0
        %v966 = vmax.f32 %v860, 0.0
        %v967 = vmax.f32 %v862, 0.0
        %v968 = vmax.f32 %v527, 0.0
        %v969 = vmax.f32 %v529, 0.0
        %v970 = vmax.f32 %v640, 0.0
        %v971 = vmax.f32 %v642, 0.0
        %v972 = vmax.f32 %v753, 0.0
        %v973 = vmax.f32 %v755, 0.0
        %v974 = vmax.f32 %v866, 0.0
        %v975 = vmax.f32 %v868, 0.0
        %v976 = vmax.f32 %v531, 0.0
        %v977 = vmax.f32 %v533, 0.0
        %v978 = vmax.f32 %v644, 0.0
        %v979 = vmax.f32 %v646, 0.0
        %v980 = vmax.f32 %v757, 0.0
        %v981 = vmax.f32 %v759, 0.0
        %v982 = vmax.f32 %v870, 0.0
        %v983 = vmax.f32 %v872, 0.0
        %v984 = vmax.f32 %v537, 0.0
        %v985 = vmax.f32 %v539, 0.0
        %v986 = vmax.f32 %v650, 0.0
        %v987 = vmax.f32 %v652, 0.0
        %v988 = vmax.f32 %v763, 0.0
        %v989 = vmax.f32 %v765, 0.0
        %v990 = vmax.f32 %v876, 0.0
        %v991 = vmax.f32 %v878, 0.0
        %v992 = vmax.f32 %v541, 0.0
        %v993 = vmax.f32 %v543, 0.0
        %v994 = vmax.f32 %v654, 0.0
        %v995 = vmax.f32 %v656, 0.0
        %v996 = vmax.f32 %v767, 0.0
        %v997 = vmax.f32 %v769, 0.0
        %v998 = vmax.f32 %v880, 0.0
        %v999 = vmax.f32 %v882, 0.0
        %v1000 = vmax.f32 %v547, 0.0
        %v1001 = vmax.f32 %v549, 0.0
        %v1002 = vmax.f32 %v660, 0.0
        %v1003 = vmax.f32 %v662, 0.0
        %v1004 = vmax.f32 %v773, 0.0
        %v1005 = vmax.f32 %v775, 0.0
        %v1006 = vmax.f32 %v886, 0.0
        %v1007 = vmax.f32 %v888, 0.0
        %v1008 = vmax.f32 %v551, 0.0
        %v1009 = vmax.f32 %v553, 0.0
        %v1010 = vmax.f32 %v664, 0.0
        %v1011 = vmax.f32 %v666, 0.0
        %v1012 = vmax.f32 %v777, 0.0
        %v1013 = vmax.f32 %v779, 0.0
        %v1014 = vmax.f32 %v890, 0.0
        %v1015 = vmax.f32 %v892, 0.0
        %v1016 = vmax.f32 %v557, 0.0
        %v1017 = vmax.f32 %v559, 0.0
        %v1018 = vmax.f32 %v670, 0.0
        %v1019 = vmax.f32 %v672, 0.0
        %v1020 = vmax.f32 %v783, 0.0
        %v1021 = vmax.f32 %v785, 0.0
        %v1022 = vmax.f32 %v896, 0.0
        %v1023 = vmax.f32 %v898, 0.0
        %v1024 = vmax.f32 %v561, 0.0
        %v1025 = vmax.f32 %v563, 0.0
        %v1026 = vmax.f32 %v674, 0.0
        %v1027 = vmax.f32 %v676, 0.0
        %v1028 = vmax.f32 %v787, 0.0
        %v1029 = vmax.f32 %v789, 0.0
        %v1030 = vmax.f32 %v900, 0.0
        %v1031 = vmax.f32 %v902, 0.0
        %v1032 = vld [vmem:[%s2] sm:$0xf]
        %v1033 = vld [vmem:[%s2 + $0x4] sm:$0xf]
        %v1034 = vld [vmem:[%s2 + $0x8] sm:$0xf]
        %v1035 = vld [vmem:[%s2 + $0xc] sm:$0xf]
        %v1036 = vld [vmem:[%s2 + $0x10] sm:$0xf]
        %v1037 = vld [vmem:[%s2 + $0x14] sm:$0xf]
        %v1038 = vld [vmem:[%s2 + $0x18] sm:$0xf]
        %v1039 = vld [vmem:[%s2 + $0x1c] sm:$0xf]
        %v1040 = vld [vmem:[%s2 + $0x20] sm:$0xf]
        %v1041 = vld [vmem:[%s2 + $0x24] sm:$0xf]
        %v1042 = vld [vmem:[%s2 + $0x28] sm:$0xf]
        %v1043 = vld [vmem:[%s2 + $0x2c] sm:$0xf]
        %v1044 = vld [vmem:[%s2 + $0x30] sm:$0xf]
        %v1045 = vld [vmem:[%s2 + $0x34] sm:$0xf]
        %v1046 = vld [vmem:[%s2 + $0x38] sm:$0xf]
        %v1047 = vld [vmem:[%s2 + $0x3c] sm:$0xf]
        %v1048 = vpack.c.bf16 %v912, %v904
        %v1049 = vpack.c.bf16 %v913, %v905
        %v1050 = vpack.c.bf16 %v914, %v906
        %v1051 = vpack.c.bf16 %v915, %v907
        %v1052 = vpack.c.bf16 %v916, %v908
        %v1053 = vpack.c.bf16 %v917, %v909
        %v1054 = vpack.c.bf16 %v918, %v910
        %v1055 = vpack.c.bf16 %v919, %v911
        %v1056 = vpack.c.bf16 %v928, %v920
        %v1057 = vpack.c.bf16 %v929, %v921
        %v1058 = vpack.c.bf16 %v930, %v922
        %v1059 = vpack.c.bf16 %v931, %v923
        %v1060 = vpack.c.bf16 %v932, %v924
        %v1061 = vpack.c.bf16 %v933, %v925
        %v1062 = vpack.c.bf16 %v934, %v926
        %v1063 = vpack.c.bf16 %v935, %v927
        %v1064 = vpack.c.bf16 %v944, %v936
        %v1065 = vpack.c.bf16 %v945, %v937
        %v1066 = vpack.c.bf16 %v946, %v938
        %v1067 = vpack.c.bf16 %v947, %v939
        %v1068 = vpack.c.bf16 %v948, %v940
        %v1069 = vpack.c.bf16 %v949, %v941
        %v1070 = vpack.c.bf16 %v950, %v942
        %v1071 = vpack.c.bf16 %v951, %v943
        %v1072 = vpack.c.bf16 %v960, %v952
        %v1073 = vpack.c.bf16 %v961, %v953
        %v1074 = vpack.c.bf16 %v962, %v954
        %v1075 = vpack.c.bf16 %v963, %v955
        %v1076 = vpack.c.bf16 %v964, %v956
        %v1077 = vpack.c.bf16 %v965, %v957
        %v1078 = vpack.c.bf16 %v966, %v958
        %v1079 = vpack.c.bf16 %v967, %v959
        %v1080 = vpack.c.bf16 %v976, %v968
        %v1081 = vpack.c.bf16 %v977, %v969
        %v1082 = vpack.c.bf16 %v978, %v970
        %v1083 = vpack.c.bf16 %v979, %v971
        %v1084 = vpack.c.bf16 %v980, %v972
        %v1085 = vpack.c.bf16 %v981, %v973
        %v1086 = vpack.c.bf16 %v982, %v974
        %v1087 = vpack.c.bf16 %v983, %v975
        %v1088 = vpack.c.bf16 %v992, %v984
        %v1089 = vpack.c.bf16 %v993, %v985
        %v1090 = vpack.c.bf16 %v994, %v986
        %v1091 = vpack.c.bf16 %v995, %v987
        %v1092 = vpack.c.bf16 %v996, %v988
        %v1093 = vpack.c.bf16 %v997, %v989
        %v1094 = vpack.c.bf16 %v998, %v990
        %v1095 = vpack.c.bf16 %v999, %v991
        %v1096 = vpack.c.bf16 %v1008, %v1000
        %v1097 = vpack.c.bf16 %v1009, %v1001
        %v1098 = vpack.c.bf16 %v1010, %v1002
        %v1099 = vpack.c.bf16 %v1011, %v1003
        %v1100 = vpack.c.bf16 %v1012, %v1004
        %v1101 = vpack.c.bf16 %v1013, %v1005
        %v1102 = vpack.c.bf16 %v1014, %v1006
        %v1103 = vpack.c.bf16 %v1015, %v1007
        %v1104 = vpack.c.bf16 %v1024, %v1016
        %v1105 = vpack.c.bf16 %v1025, %v1017
        %v1106 = vpack.c.bf16 %v1026, %v1018
        %v1107 = vpack.c.bf16 %v1027, %v1019
        %v1108 = vpack.c.bf16 %v1028, %v1020
        %v1109 = vpack.c.bf16 %v1029, %v1021
        %v1110 = vpack.c.bf16 %v1030, %v1022
        %v1111 = vpack.c.bf16 %v1031, %v1023
        %v1112 = vld [vmem:[%s3] sm:$0xff]
        %v1113 = vld [vmem:[%s3 + $0x8] sm:$0xff]
        %v1114 = vld [vmem:[%s3 + $0x10] sm:$0xff]
        %v1115 = vld [vmem:[%s3 + $0x18] sm:$0xff]
        %v1116 = vld [vmem:[%s3 + $0x20] sm:$0xff]
        %v1117 = vld [vmem:[%s3 + $0x28] sm:$0xff]
        %v1118 = vld [vmem:[%s3 + $0x30] sm:$0xff]
        %v1119 = vld [vmem:[%s3 + $0x38] sm:$0xff]
        %v1120 = vld [vmem:[%s3 + $0x40] sm:$0xff]
        %v1121 = vld [vmem:[%s3 + $0x48] sm:$0xff]
        %v1122 = vld [vmem:[%s3 + $0x50] sm:$0xff]
        %v1123 = vld [vmem:[%s3 + $0x58] sm:$0xff]
        %v1124 = vld [vmem:[%s3 + $0x60] sm:$0xff]
        %v1125 = vld [vmem:[%s3 + $0x68] sm:$0xff]
        %v1126 = vld [vmem:[%s3 + $0x70] sm:$0xff]
        %v1127 = vld [vmem:[%s3 + $0x78] sm:$0xff]
        %1129 = vset.pattern.permute.xlu0 0
        %1130 = vperm.xlu0 %1129, %v1112
        %v1131 = vpop.permute.xlu0 %1130
        %1134 = vset.pattern.permute.xlu0 0
        %1135 = vperm.xlu0 %1134, %v1113
        %v1136 = vpop.permute.xlu0 %1135
        %1139 = vset.pattern.permute.xlu0 0
        %1140 = vperm.xlu0 %1139, %v1114
        %v1141 = vpop.permute.xlu0 %1140
        %1144 = vset.pattern.permute.xlu0 0
        %1145 = vperm.xlu0 %1144, %v1115
        %v1146 = vpop.permute.xlu0 %1145
        %1149 = vset.pattern.permute.xlu0 0
        %1150 = vperm.xlu0 %1149, %v1116
        %v1151 = vpop.permute.xlu0 %1150
        %1154 = vset.pattern.permute.xlu0 0
        %1155 = vperm.xlu0 %1154, %v1117
        %v1156 = vpop.permute.xlu0 %1155
        %1159 = vset.pattern.permute.xlu0 0
        %1160 = vperm.xlu0 %1159, %v1118
        %v1161 = vpop.permute.xlu0 %1160
        %1164 = vset.pattern.permute.xlu0 0
        %1165 = vperm.xlu0 %1164, %v1119
        %v1166 = vpop.permute.xlu0 %1165
        %1169 = vset.pattern.permute.xlu0 0
        %1170 = vperm.xlu0 %1169, %v1120
        %v1171 = vpop.permute.xlu0 %1170
        %1174 = vset.pattern.permute.xlu0 0
        %1175 = vperm.xlu0 %1174, %v1121
        %v1176 = vpop.permute.xlu0 %1175
        %1179 = vset.pattern.permute.xlu0 0
        %1180 = vperm.xlu0 %1179, %v1122
        %v1181 = vpop.permute.xlu0 %1180
        %1184 = vset.pattern.permute.xlu0 0
        %1185 = vperm.xlu0 %1184, %v1123
        %v1186 = vpop.permute.xlu0 %1185
        %1189 = vset.pattern.permute.xlu0 0
        %1190 = vperm.xlu0 %1189, %v1124
        %v1191 = vpop.permute.xlu0 %1190
        %1194 = vset.pattern.permute.xlu0 0
        %1195 = vperm.xlu0 %1194, %v1125
        %v1196 = vpop.permute.xlu0 %1195
        %1199 = vset.pattern.permute.xlu0 0
        %1200 = vperm.xlu0 %1199, %v1126
        %v1201 = vpop.permute.xlu0 %1200
        %1204 = vset.pattern.permute.xlu0 0
        %1205 = vperm.xlu0 %1204, %v1127
        %v1206 = vpop.permute.xlu0 %1205
        %v1224 = vunpack.c.l.b16 %v1032
        %v1225 = vunpack.c.l.b16 %v1033
        %v1226 = vunpack.c.l.b16 %v1034
        %v1227 = vunpack.c.l.b16 %v1035
        %v1228 = vunpack.c.l.b16 %v1036
        %v1229 = vunpack.c.l.b16 %v1037
        %v1230 = vunpack.c.l.b16 %v1038
        %v1231 = vunpack.c.l.b16 %v1039
        %v1232 = vunpack.c.l.b16 %v1040
        %v1233 = vunpack.c.l.b16 %v1041
        %v1234 = vunpack.c.l.b16 %v1042
        %v1235 = vunpack.c.l.b16 %v1043
        %v1236 = vunpack.c.l.b16 %v1044
        %v1237 = vunpack.c.l.b16 %v1045
        %v1238 = vunpack.c.l.b16 %v1046
        %v1239 = vunpack.c.l.b16 %v1047
        %v1240 = vpack.c.b16 %v1225, %v1224
        %v1241 = vpack.c.b16 %v1227, %v1226
        %v1242 = vpack.c.b16 %v1229, %v1228
        %v1243 = vpack.c.b16 %v1231, %v1230
        %v1244 = vpack.c.b16 %v1233, %v1232
        %v1245 = vpack.c.b16 %v1235, %v1234
        %v1246 = vpack.c.b16 %v1237, %v1236
        %v1247 = vpack.c.b16 %v1239, %v1238
        %1256 = vmatprep.subr.bf16.mxu0 %v1105
        %1257 = vmatpush1.bf16.msra.mxu0 %v1104
        %1258 = vmatprep.subr.bf16.mxu0 %v1097
        %1259 = vmatpush1.bf16.msra.mxu0 %v1096
        %1260 = vmatprep.subr.bf16.mxu0 %v1089
        %1261 = vmatpush1.bf16.msra.mxu0 %v1088
        %1262 = vmatprep.subr.bf16.mxu0 %v1081
        %1263 = vmatpush1.bf16.msra.mxu0 %v1080
        %1264 = vmatprep.subr.bf16.mxu0 %v1073
        %1265 = vmatpush1.bf16.msra.mxu0 %v1072
        %1266 = vmatprep.subr.bf16.mxu0 %v1065
        %1267 = vmatpush1.bf16.msra.mxu0 %v1064
        %1268 = vmatprep.subr.bf16.mxu0 %v1057
        %1269 = vmatpush1.bf16.msra.mxu0 %v1056
        %1270 = vmatprep.subr.bf16.mxu0 %v1049
        %1271 = vmatpush1.bf16.msra.mxu0 %v1048
        %1272 = vmatprep.subr.bf16.mxu0 0
        %1273 = vmatpush2.bf16.msra.mxu0 0
        %1274 = vmatprep.subr.bf16.mxu0 0
        %1275 = vmatpush2.bf16.msra.mxu0 0
        %1276 = vmatprep.subr.bf16.mxu0 0
        %1277 = vmatpush2.bf16.msra.mxu0 0
        %1278 = vmatprep.subr.bf16.mxu0 0
        %1279 = vmatpush2.bf16.msra.mxu0 0
        %1280 = vmatprep.subr.bf16.mxu0 0
        %1281 = vmatpush2.bf16.msra.mxu0 0
        %1282 = vmatprep.subr.bf16.mxu0 0
        %1283 = vmatpush2.bf16.msra.mxu0 0
        %1284 = vmatprep.subr.bf16.mxu0 0
        %1285 = vmatpush2.bf16.msra.mxu0 0
        %1286 = vmatprep.subr.bf16.mxu0 0
        %1287 = vmatpush2.bf16.msra.mxu0 0
        %1288 = vmatprep.mubr.bf16.mxu0 0
        %1289 = vmatmul.mubr.bf16.gmra.mxu0 %v1240
        %v1290 = vpop.f32.mrf.mxu0
        %v1291 = vadd.f32 %v1131, %v1290
        %v1292 = vpop.f32.mrf.mxu0
        %v1293 = vadd.f32 %v1131, %v1292
        %v1294 = vpop.f32.mrf.mxu0
        %v1295 = vadd.f32 %v1136, %v1294
        %v1296 = vpop.f32.mrf.mxu0
        %v1297 = vadd.f32 %v1136, %v1296
        %1298 = vmatprep.mubr.bf16.mxu0 0
        %1299 = vmatmul.mubr.bf16.gmra.mxu0 %v1241
        %v1300 = vpop.f32.mrf.mxu0
        %v1301 = vadd.f32 %v1141, %v1300
        %v1302 = vpop.f32.mrf.mxu0
        %v1303 = vadd.f32 %v1141, %v1302
        %v1304 = vpop.f32.mrf.mxu0
        %v1305 = vadd.f32 %v1146, %v1304
        %v1306 = vpop.f32.mrf.mxu0
        %v1307 = vadd.f32 %v1146, %v1306
        %1308 = vmatprep.mubr.bf16.mxu0 0
        %1309 = vmatmul.mubr.bf16.gmra.mxu0 %v1242
        %v1310 = vpop.f32.mrf.mxu0
        %v1311 = vadd.f32 %v1151, %v1310
        %v1312 = vpop.f32.mrf.mxu0
        %v1313 = vadd.f32 %v1151, %v1312
        %v1314 = vpop.f32.mrf.mxu0
        %v1315 = vadd.f32 %v1156, %v1314
        %v1316 = vpop.f32.mrf.mxu0
        %v1317 = vadd.f32 %v1156, %v1316
        %1318 = vmatprep.mubr.bf16.mxu0 0
        %1319 = vmatmul.mubr.bf16.gmra.mxu0 %v1243
        %v1320 = vpop.f32.mrf.mxu0
        %v1321 = vadd.f32 %v1161, %v1320
        %v1322 = vpop.f32.mrf.mxu0
        %v1323 = vadd.f32 %v1161, %v1322
        %v1324 = vpop.f32.mrf.mxu0
        %v1325 = vadd.f32 %v1166, %v1324
        %v1326 = vpop.f32.mrf.mxu0
        %v1327 = vadd.f32 %v1166, %v1326
        %1328 = vmatprep.mubr.bf16.mxu0 0
        %1329 = vmatmul.mubr.bf16.gmra.mxu0 %v1244
        %v1330 = vpop.f32.mrf.mxu0
        %v1331 = vadd.f32 %v1171, %v1330
        %v1332 = vpop.f32.mrf.mxu0
        %v1333 = vadd.f32 %v1171, %v1332
        %v1334 = vpop.f32.mrf.mxu0
        %v1335 = vadd.f32 %v1176, %v1334
        %v1336 = vpop.f32.mrf.mxu0
        %v1337 = vadd.f32 %v1176, %v1336
        %1338 = vmatprep.mubr.bf16.mxu0 0
        %1339 = vmatmul.mubr.bf16.gmra.mxu0 %v1245
        %v1340 = vpop.f32.mrf.mxu0
        %v1341 = vadd.f32 %v1181, %v1340
        %v1342 = vpop.f32.mrf.mxu0
        %v1343 = vadd.f32 %v1181, %v1342
        %v1344 = vpop.f32.mrf.mxu0
        %v1345 = vadd.f32 %v1186, %v1344
        %v1346 = vpop.f32.mrf.mxu0
        %v1347 = vadd.f32 %v1186, %v1346
        %1348 = vmatprep.mubr.bf16.mxu0 0
        %1349 = vmatmul.mubr.bf16.gmra.mxu0 %v1246
        %v1350 = vpop.f32.mrf.mxu0
        %v1351 = vadd.f32 %v1191, %v1350
        %v1352 = vpop.f32.mrf.mxu0
        %v1353 = vadd.f32 %v1191, %v1352
        %v1354 = vpop.f32.mrf.mxu0
        %v1355 = vadd.f32 %v1196, %v1354
        %v1356 = vpop.f32.mrf.mxu0
        %v1357 = vadd.f32 %v1196, %v1356
        %1358 = vmatprep.mubr.bf16.mxu0 0
        %1359 = vmatmul.mubr.bf16.gmra.mxu0 %v1247
        %v1360 = vpop.f32.mrf.mxu0
        %v1361 = vadd.f32 %v1201, %v1360
        %v1362 = vpop.f32.mrf.mxu0
        %v1363 = vadd.f32 %v1201, %v1362
        %v1364 = vpop.f32.mrf.mxu0
        %v1365 = vadd.f32 %v1206, %v1364
        %v1366 = vpop.f32.mrf.mxu0
        %v1367 = vadd.f32 %v1206, %v1366
        %1368 = vdwg.mxu0
        %1369 = vmatprep.subr.bf16.mxu0 %v1107
        %1370 = vmatpush1.bf16.msra.mxu0 %v1106
        %1371 = vmatprep.subr.bf16.mxu0 %v1099
        %1372 = vmatpush1.bf16.msra.mxu0 %v1098
        %1373 = vmatprep.subr.bf16.mxu0 %v1091
        %1374 = vmatpush1.bf16.msra.mxu0 %v1090
        %1375 = vmatprep.subr.bf16.mxu0 %v1083
        %1376 = vmatpush1.bf16.msra.mxu0 %v1082
        %1377 = vmatprep.subr.bf16.mxu0 %v1075
        %1378 = vmatpush1.bf16.msra.mxu0 %v1074
        %1379 = vmatprep.subr.bf16.mxu0 %v1067
        %1380 = vmatpush1.bf16.msra.mxu0 %v1066
        %1381 = vmatprep.subr.bf16.mxu0 %v1059
        %1382 = vmatpush1.bf16.msra.mxu0 %v1058
        %1383 = vmatprep.subr.bf16.mxu0 %v1051
        %1384 = vmatpush1.bf16.msra.mxu0 %v1050
        %1385 = vmatprep.subr.bf16.mxu0 0
        %1386 = vmatpush2.bf16.msra.mxu0 0
        %1387 = vmatprep.subr.bf16.mxu0 0
        %1388 = vmatpush2.bf16.msra.mxu0 0
        %1389 = vmatprep.subr.bf16.mxu0 0
        %1390 = vmatpush2.bf16.msra.mxu0 0
        %1391 = vmatprep.subr.bf16.mxu0 0
        %1392 = vmatpush2.bf16.msra.mxu0 0
        %1393 = vmatprep.subr.bf16.mxu0 0
        %1394 = vmatpush2.bf16.msra.mxu0 0
        %1395 = vmatprep.subr.bf16.mxu0 0
        %1396 = vmatpush2.bf16.msra.mxu0 0
        %1397 = vmatprep.subr.bf16.mxu0 0
        %1398 = vmatpush2.bf16.msra.mxu0 0
        %1399 = vmatprep.subr.bf16.mxu0 0
        %1400 = vmatpush2.bf16.msra.mxu0 0
        %1401 = vmatprep.mubr.bf16.mxu0 0
        %1402 = vmatmul.mubr.bf16.gmra.mxu0 %v1240
        %v1403 = vpop.f32.mrf.mxu0
        %v1404 = vadd.f32 %v1131, %v1403
        %v1405 = vpop.f32.mrf.mxu0
        %v1406 = vadd.f32 %v1131, %v1405
        %v1407 = vpop.f32.mrf.mxu0
        %v1408 = vadd.f32 %v1136, %v1407
        %v1409 = vpop.f32.mrf.mxu0
        %v1410 = vadd.f32 %v1136, %v1409
        %1411 = vmatprep.mubr.bf16.mxu0 0
        %1412 = vmatmul.mubr.bf16.gmra.mxu0 %v1241
        %v1413 = vpop.f32.mrf.mxu0
        %v1414 = vadd.f32 %v1141, %v1413
        %v1415 = vpop.f32.mrf.mxu0
        %v1416 = vadd.f32 %v1141, %v1415
        %v1417 = vpop.f32.mrf.mxu0
        %v1418 = vadd.f32 %v1146, %v1417
        %v1419 = vpop.f32.mrf.mxu0
        %v1420 = vadd.f32 %v1146, %v1419
        %1421 = vmatprep.mubr.bf16.mxu0 0
        %1422 = vmatmul.mubr.bf16.gmra.mxu0 %v1242
        %v1423 = vpop.f32.mrf.mxu0
        %v1424 = vadd.f32 %v1151, %v1423
        %v1425 = vpop.f32.mrf.mxu0
        %v1426 = vadd.f32 %v1151, %v1425
        %v1427 = vpop.f32.mrf.mxu0
        %v1428 = vadd.f32 %v1156, %v1427
        %v1429 = vpop.f32.mrf.mxu0
        %v1430 = vadd.f32 %v1156, %v1429
        %1431 = vmatprep.mubr.bf16.mxu0 0
        %1432 = vmatmul.mubr.bf16.gmra.mxu0 %v1243
        %v1433 = vpop.f32.mrf.mxu0
        %v1434 = vadd.f32 %v1161, %v1433
        %v1435 = vpop.f32.mrf.mxu0
        %v1436 = vadd.f32 %v1161, %v1435
        %v1437 = vpop.f32.mrf.mxu0
        %v1438 = vadd.f32 %v1166, %v1437
        %v1439 = vpop.f32.mrf.mxu0
        %v1440 = vadd.f32 %v1166, %v1439
        %1441 = vmatprep.mubr.bf16.mxu0 0
        %1442 = vmatmul.mubr.bf16.gmra.mxu0 %v1244
        %v1443 = vpop.f32.mrf.mxu0
        %v1444 = vadd.f32 %v1171, %v1443
        %v1445 = vpop.f32.mrf.mxu0
        %v1446 = vadd.f32 %v1171, %v1445
        %v1447 = vpop.f32.mrf.mxu0
        %v1448 = vadd.f32 %v1176, %v1447
        %v1449 = vpop.f32.mrf.mxu0
        %v1450 = vadd.f32 %v1176, %v1449
        %1451 = vmatprep.mubr.bf16.mxu0 0
        %1452 = vmatmul.mubr.bf16.gmra.mxu0 %v1245
        %v1453 = vpop.f32.mrf.mxu0
        %v1454 = vadd.f32 %v1181, %v1453
        %v1455 = vpop.f32.mrf.mxu0
        %v1456 = vadd.f32 %v1181, %v1455
        %v1457 = vpop.f32.mrf.mxu0
        %v1458 = vadd.f32 %v1186, %v1457
        %v1459 = vpop.f32.mrf.mxu0
        %v1460 = vadd.f32 %v1186, %v1459
        %1461 = vmatprep.mubr.bf16.mxu0 0
        %1462 = vmatmul.mubr.bf16.gmra.mxu0 %v1246
        %v1463 = vpop.f32.mrf.mxu0
        %v1464 = vadd.f32 %v1191, %v1463
        %v1465 = vpop.f32.mrf.mxu0
        %v1466 = vadd.f32 %v1191, %v1465
        %v1467 = vpop.f32.mrf.mxu0
        %v1468 = vadd.f32 %v1196, %v1467
        %v1469 = vpop.f32.mrf.mxu0
        %v1470 = vadd.f32 %v1196, %v1469
        %1471 = vmatprep.mubr.bf16.mxu0 0
        %1472 = vmatmul.mubr.bf16.gmra.mxu0 %v1247
        %v1473 = vpop.f32.mrf.mxu0
        %v1474 = vadd.f32 %v1201, %v1473
        %v1475 = vpop.f32.mrf.mxu0
        %v1476 = vadd.f32 %v1201, %v1475
        %v1477 = vpop.f32.mrf.mxu0
        %v1478 = vadd.f32 %v1206, %v1477
        %v1479 = vpop.f32.mrf.mxu0
        %v1480 = vadd.f32 %v1206, %v1479
        %1481 = vdwg.mxu0
        %1482 = vmatprep.subr.bf16.mxu0 %v1109
        %1483 = vmatpush1.bf16.msra.mxu0 %v1108
        %1484 = vmatprep.subr.bf16.mxu0 %v1101
        %1485 = vmatpush1.bf16.msra.mxu0 %v1100
        %1486 = vmatprep.subr.bf16.mxu0 %v1093
        %1487 = vmatpush1.bf16.msra.mxu0 %v1092
        %1488 = vmatprep.subr.bf16.mxu0 %v1085
        %1489 = vmatpush1.bf16.msra.mxu0 %v1084
        %1490 = vmatprep.subr.bf16.mxu0 %v1077
        %1491 = vmatpush1.bf16.msra.mxu0 %v1076
        %1492 = vmatprep.subr.bf16.mxu0 %v1069
        %1493 = vmatpush1.bf16.msra.mxu0 %v1068
        %1494 = vmatprep.subr.bf16.mxu0 %v1061
        %1495 = vmatpush1.bf16.msra.mxu0 %v1060
        %1496 = vmatprep.subr.bf16.mxu0 %v1053
        %1497 = vmatpush1.bf16.msra.mxu0 %v1052
        %1498 = vmatprep.subr.bf16.mxu0 0
        %1499 = vmatpush2.bf16.msra.mxu0 0
        %1500 = vmatprep.subr.bf16.mxu0 0
        %1501 = vmatpush2.bf16.msra.mxu0 0
        %1502 = vmatprep.subr.bf16.mxu0 0
        %1503 = vmatpush2.bf16.msra.mxu0 0
        %1504 = vmatprep.subr.bf16.mxu0 0
        %1505 = vmatpush2.bf16.msra.mxu0 0
        %1506 = vmatprep.subr.bf16.mxu0 0
        %1507 = vmatpush2.bf16.msra.mxu0 0
        %1508 = vmatprep.subr.bf16.mxu0 0
        %1509 = vmatpush2.bf16.msra.mxu0 0
        %1510 = vmatprep.subr.bf16.mxu0 0
        %1511 = vmatpush2.bf16.msra.mxu0 0
        %1512 = vmatprep.subr.bf16.mxu0 0
        %1513 = vmatpush2.bf16.msra.mxu0 0
        %1514 = vmatprep.mubr.bf16.mxu0 0
        %1515 = vmatmul.mubr.bf16.gmra.mxu0 %v1240
        %v1516 = vpop.f32.mrf.mxu0
        %v1517 = vadd.f32 %v1131, %v1516
        %v1518 = vpop.f32.mrf.mxu0
        %v1519 = vadd.f32 %v1131, %v1518
        %v1520 = vpop.f32.mrf.mxu0
        %v1521 = vadd.f32 %v1136, %v1520
        %v1522 = vpop.f32.mrf.mxu0
        %v1523 = vadd.f32 %v1136, %v1522
        %1524 = vmatprep.mubr.bf16.mxu0 0
        %1525 = vmatmul.mubr.bf16.gmra.mxu0 %v1241
        %v1526 = vpop.f32.mrf.mxu0
        %v1527 = vadd.f32 %v1141, %v1526
        %v1528 = vpop.f32.mrf.mxu0
        %v1529 = vadd.f32 %v1141, %v1528
        %v1530 = vpop.f32.mrf.mxu0
        %v1531 = vadd.f32 %v1146, %v1530
        %v1532 = vpop.f32.mrf.mxu0
        %v1533 = vadd.f32 %v1146, %v1532
        %1534 = vmatprep.mubr.bf16.mxu0 0
        %1535 = vmatmul.mubr.bf16.gmra.mxu0 %v1242
        %v1536 = vpop.f32.mrf.mxu0
        %v1537 = vadd.f32 %v1151, %v1536
        %v1538 = vpop.f32.mrf.mxu0
        %v1539 = vadd.f32 %v1151, %v1538
        %v1540 = vpop.f32.mrf.mxu0
        %v1541 = vadd.f32 %v1156, %v1540
        %v1542 = vpop.f32.mrf.mxu0
        %v1543 = vadd.f32 %v1156, %v1542
        %1544 = vmatprep.mubr.bf16.mxu0 0
        %1545 = vmatmul.mubr.bf16.gmra.mxu0 %v1243
        %v1546 = vpop.f32.mrf.mxu0
        %v1547 = vadd.f32 %v1161, %v1546
        %v1548 = vpop.f32.mrf.mxu0
        %v1549 = vadd.f32 %v1161, %v1548
        %v1550 = vpop.f32.mrf.mxu0
        %v1551 = vadd.f32 %v1166, %v1550
        %v1552 = vpop.f32.mrf.mxu0
        %v1553 = vadd.f32 %v1166, %v1552
        %1554 = vmatprep.mubr.bf16.mxu0 0
        %1555 = vmatmul.mubr.bf16.gmra.mxu0 %v1244
        %v1556 = vpop.f32.mrf.mxu0
        %v1557 = vadd.f32 %v1171, %v1556
        %v1558 = vpop.f32.mrf.mxu0
        %v1559 = vadd.f32 %v1171, %v1558
        %v1560 = vpop.f32.mrf.mxu0
        %v1561 = vadd.f32 %v1176, %v1560
        %v1562 = vpop.f32.mrf.mxu0
        %v1563 = vadd.f32 %v1176, %v1562
        %1564 = vmatprep.mubr.bf16.mxu0 0
        %1565 = vmatmul.mubr.bf16.gmra.mxu0 %v1245
        %v1566 = vpop.f32.mrf.mxu0
        %v1567 = vadd.f32 %v1181, %v1566
        %v1568 = vpop.f32.mrf.mxu0
        %v1569 = vadd.f32 %v1181, %v1568
        %v1570 = vpop.f32.mrf.mxu0
        %v1571 = vadd.f32 %v1186, %v1570
        %v1572 = vpop.f32.mrf.mxu0
        %v1573 = vadd.f32 %v1186, %v1572
        %1574 = vmatprep.mubr.bf16.mxu0 0
        %1575 = vmatmul.mubr.bf16.gmra.mxu0 %v1246
        %v1576 = vpop.f32.mrf.mxu0
        %v1577 = vadd.f32 %v1191, %v1576
        %v1578 = vpop.f32.mrf.mxu0
        %v1579 = vadd.f32 %v1191, %v1578
        %v1580 = vpop.f32.mrf.mxu0
        %v1581 = vadd.f32 %v1196, %v1580
        %v1582 = vpop.f32.mrf.mxu0
        %v1583 = vadd.f32 %v1196, %v1582
        %1584 = vmatprep.mubr.bf16.mxu0 0
        %1585 = vmatmul.mubr.bf16.gmra.mxu0 %v1247
        %v1586 = vpop.f32.mrf.mxu0
        %v1587 = vadd.f32 %v1201, %v1586
        %v1588 = vpop.f32.mrf.mxu0
        %v1589 = vadd.f32 %v1201, %v1588
        %v1590 = vpop.f32.mrf.mxu0
        %v1591 = vadd.f32 %v1206, %v1590
        %v1592 = vpop.f32.mrf.mxu0
        %v1593 = vadd.f32 %v1206, %v1592
        %1594 = vdwg.mxu0
        %1595 = vmatprep.subr.bf16.mxu0 %v1111
        %1596 = vmatpush1.bf16.msra.mxu0 %v1110
        %1597 = vmatprep.subr.bf16.mxu0 %v1103
        %1598 = vmatpush1.bf16.msra.mxu0 %v1102
        %1599 = vmatprep.subr.bf16.mxu0 %v1095
        %1600 = vmatpush1.bf16.msra.mxu0 %v1094
        %1601 = vmatprep.subr.bf16.mxu0 %v1087
        %1602 = vmatpush1.bf16.msra.mxu0 %v1086
        %1603 = vmatprep.subr.bf16.mxu0 %v1079
        %1604 = vmatpush1.bf16.msra.mxu0 %v1078
        %1605 = vmatprep.subr.bf16.mxu0 %v1071
        %1606 = vmatpush1.bf16.msra.mxu0 %v1070
        %1607 = vmatprep.subr.bf16.mxu0 %v1063
        %1608 = vmatpush1.bf16.msra.mxu0 %v1062
        %1609 = vmatprep.subr.bf16.mxu0 %v1055
        %1610 = vmatpush1.bf16.msra.mxu0 %v1054
        %1611 = vmatprep.subr.bf16.mxu0 0
        %1612 = vmatpush2.bf16.msra.mxu0 0
        %1613 = vmatprep.subr.bf16.mxu0 0
        %1614 = vmatpush2.bf16.msra.mxu0 0
        %1615 = vmatprep.subr.bf16.mxu0 0
        %1616 = vmatpush2.bf16.msra.mxu0 0
        %1617 = vmatprep.subr.bf16.mxu0 0
        %1618 = vmatpush2.bf16.msra.mxu0 0
        %1619 = vmatprep.subr.bf16.mxu0 0
        %1620 = vmatpush2.bf16.msra.mxu0 0
        %1621 = vmatprep.subr.bf16.mxu0 0
        %1622 = vmatpush2.bf16.msra.mxu0 0
        %1623 = vmatprep.subr.bf16.mxu0 0
        %1624 = vmatpush2.bf16.msra.mxu0 0
        %1625 = vmatprep.subr.bf16.mxu0 0
        %1626 = vmatpush2.bf16.msra.mxu0 0
        %1627 = vmatprep.mubr.bf16.mxu0 0
        %1628 = vmatmul.mubr.bf16.gmra.mxu0 %v1240
        %v1629 = vpop.f32.mrf.mxu0
        %v1630 = vadd.f32 %v1131, %v1629
        %v1631 = vpop.f32.mrf.mxu0
        %v1632 = vadd.f32 %v1131, %v1631
        %v1633 = vpop.f32.mrf.mxu0
        %v1634 = vadd.f32 %v1136, %v1633
        %v1635 = vpop.f32.mrf.mxu0
        %v1636 = vadd.f32 %v1136, %v1635
        %1637 = vmatprep.mubr.bf16.mxu0 0
        %1638 = vmatmul.mubr.bf16.gmra.mxu0 %v1241
        %v1639 = vpop.f32.mrf.mxu0
        %v1640 = vadd.f32 %v1141, %v1639
        %v1641 = vpop.f32.mrf.mxu0
        %v1642 = vadd.f32 %v1141, %v1641
        %v1643 = vpop.f32.mrf.mxu0
        %v1644 = vadd.f32 %v1146, %v1643
        %v1645 = vpop.f32.mrf.mxu0
        %v1646 = vadd.f32 %v1146, %v1645
        %1647 = vmatprep.mubr.bf16.mxu0 0
        %1648 = vmatmul.mubr.bf16.gmra.mxu0 %v1242
        %v1649 = vpop.f32.mrf.mxu0
        %v1650 = vadd.f32 %v1151, %v1649
        %v1651 = vpop.f32.mrf.mxu0
        %v1652 = vadd.f32 %v1151, %v1651
        %v1653 = vpop.f32.mrf.mxu0
        %v1654 = vadd.f32 %v1156, %v1653
        %v1655 = vpop.f32.mrf.mxu0
        %v1656 = vadd.f32 %v1156, %v1655
        %1657 = vmatprep.mubr.bf16.mxu0 0
        %1658 = vmatmul.mubr.bf16.gmra.mxu0 %v1243
        %v1659 = vpop.f32.mrf.mxu0
        %v1660 = vadd.f32 %v1161, %v1659
        %v1661 = vpop.f32.mrf.mxu0
        %v1662 = vadd.f32 %v1161, %v1661
        %v1663 = vpop.f32.mrf.mxu0
        %v1664 = vadd.f32 %v1166, %v1663
        %v1665 = vpop.f32.mrf.mxu0
        %v1666 = vadd.f32 %v1166, %v1665
        %1667 = vmatprep.mubr.bf16.mxu0 0
        %1668 = vmatmul.mubr.bf16.gmra.mxu0 %v1244
        %v1669 = vpop.f32.mrf.mxu0
        %v1670 = vadd.f32 %v1171, %v1669
        %v1671 = vpop.f32.mrf.mxu0
        %v1672 = vadd.f32 %v1171, %v1671
        %v1673 = vpop.f32.mrf.mxu0
        %v1674 = vadd.f32 %v1176, %v1673
        %v1675 = vpop.f32.mrf.mxu0
        %v1676 = vadd.f32 %v1176, %v1675
        %1677 = vmatprep.mubr.bf16.mxu0 0
        %1678 = vmatmul.mubr.bf16.gmra.mxu0 %v1245
        %v1679 = vpop.f32.mrf.mxu0
        %v1680 = vadd.f32 %v1181, %v1679
        %v1681 = vpop.f32.mrf.mxu0
        %v1682 = vadd.f32 %v1181, %v1681
        %v1683 = vpop.f32.mrf.mxu0
        %v1684 = vadd.f32 %v1186, %v1683
        %v1685 = vpop.f32.mrf.mxu0
        %v1686 = vadd.f32 %v1186, %v1685
        %1687 = vmatprep.mubr.bf16.mxu0 0
        %1688 = vmatmul.mubr.bf16.gmra.mxu0 %v1246
        %v1689 = vpop.f32.mrf.mxu0
        %v1690 = vadd.f32 %v1191, %v1689
        %v1691 = vpop.f32.mrf.mxu0
        %v1692 = vadd.f32 %v1191, %v1691
        %v1693 = vpop.f32.mrf.mxu0
        %v1694 = vadd.f32 %v1196, %v1693
        %v1695 = vpop.f32.mrf.mxu0
        %v1696 = vadd.f32 %v1196, %v1695
        %1697 = vmatprep.mubr.bf16.mxu0 0
        %1698 = vmatmul.mubr.bf16.gmra.mxu0 %v1247
        %v1699 = vpop.f32.mrf.mxu0
        %v1700 = vadd.f32 %v1201, %v1699
        %v1701 = vpop.f32.mrf.mxu0
        %v1702 = vadd.f32 %v1201, %v1701
        %v1703 = vpop.f32.mrf.mxu0
        %v1704 = vadd.f32 %v1206, %v1703
        %v1705 = vpop.f32.mrf.mxu0
        %v1706 = vadd.f32 %v1206, %v1705
        %1707 = vdwg.mxu0
        %v1708 = vmax.f32 %v1291, 0.0
        %v1709 = vmax.f32 %v1293, 0.0
        %v1710 = vmax.f32 %v1404, 0.0
        %v1711 = vmax.f32 %v1406, 0.0
        %v1712 = vmax.f32 %v1517, 0.0
        %v1713 = vmax.f32 %v1519, 0.0
        %v1714 = vmax.f32 %v1630, 0.0
        %v1715 = vmax.f32 %v1632, 0.0
        %v1716 = vmax.f32 %v1295, 0.0
        %v1717 = vmax.f32 %v1297, 0.0
        %v1718 = vmax.f32 %v1408, 0.0
        %v1719 = vmax.f32 %v1410, 0.0
        %v1720 = vmax.f32 %v1521, 0.0
        %v1721 = vmax.f32 %v1523, 0.0
        %v1722 = vmax.f32 %v1634, 0.0
        %v1723 = vmax.f32 %v1636, 0.0
        %v1724 = vmax.f32 %v1301, 0.0
        %v1725 = vmax.f32 %v1303, 0.0
        %v1726 = vmax.f32 %v1414, 0.0
        %v1727 = vmax.f32 %v1416, 0.0
        %v1728 = vmax.f32 %v1527, 0.0
        %v1729 = vmax.f32 %v1529, 0.0
        %v1730 = vmax.f32 %v1640, 0.0
        %v1731 = vmax.f32 %v1642, 0.0
        %v1732 = vmax.f32 %v1305, 0.0
        %v1733 = vmax.f32 %v1307, 0.0
        %v1734 = vmax.f32 %v1418, 0.0
        %v1735 = vmax.f32 %v1420, 0.0
        %v1736 = vmax.f32 %v1531, 0.0
        %v1737 = vmax.f32 %v1533, 0.0
        %v1738 = vmax.f32 %v1644, 0.0
        %v1739 = vmax.f32 %v1646, 0.0
        %v1740 = vmax.f32 %v1311, 0.0
        %v1741 = vmax.f32 %v1313, 0.0
        %v1742 = vmax.f32 %v1424, 0.0
        %v1743 = vmax.f32 %v1426, 0.0
        %v1744 = vmax.f32 %v1537, 0.0
        %v1745 = vmax.f32 %v1539, 0.0
        %v1746 = vmax.f32 %v1650, 0.0
        %v1747 = vmax.f32 %v1652, 0.0
        %v1748 = vmax.f32 %v1315, 0.0
        %v1749 = vmax.f32 %v1317, 0.0
        %v1750 = vmax.f32 %v1428, 0.0
        %v1751 = vmax.f32 %v1430, 0.0
        %v1752 = vmax.f32 %v1541, 0.0
        %v1753 = vmax.f32 %v1543, 0.0
        %v1754 = vmax.f32 %v1654, 0.0
        %v1755 = vmax.f32 %v1656, 0.0
        %v1756 = vmax.f32 %v1321, 0.0
        %v1757 = vmax.f32 %v1323, 0.0
        %v1758 = vmax.f32 %v1434, 0.0
        %v1759 = vmax.f32 %v1436, 0.0
        %v1760 = vmax.f32 %v1547, 0.0
        %v1761 = vmax.f32 %v1549, 0.0
        %v1762 = vmax.f32 %v1660, 0.0
        %v1763 = vmax.f32 %v1662, 0.0
        %v1764 = vmax.f32 %v1325, 0.0
        %v1765 = vmax.f32 %v1327, 0.0
        %v1766 = vmax.f32 %v1438, 0.0
        %v1767 = vmax.f32 %v1440, 0.0
        %v1768 = vmax.f32 %v1551, 0.0
        %v1769 = vmax.f32 %v1553, 0.0
        %v1770 = vmax.f32 %v1664, 0.0
        %v1771 = vmax.f32 %v1666, 0.0
        %v1772 = vmax.f32 %v1331, 0.0
        %v1773 = vmax.f32 %v1333, 0.0
        %v1774 = vmax.f32 %v1444, 0.0
        %v1775 = vmax.f32 %v1446, 0.0
        %v1776 = vmax.f32 %v1557, 0.0
        %v1777 = vmax.f32 %v1559, 0.0
        %v1778 = vmax.f32 %v1670, 0.0
        %v1779 = vmax.f32 %v1672, 0.0
        %v1780 = vmax.f32 %v1335, 0.0
        %v1781 = vmax.f32 %v1337, 0.0
        %v1782 = vmax.f32 %v1448, 0.0
        %v1783 = vmax.f32 %v1450, 0.0
        %v1784 = vmax.f32 %v1561, 0.0
        %v1785 = vmax.f32 %v1563, 0.0
        %v1786 = vmax.f32 %v1674, 0.0
        %v1787 = vmax.f32 %v1676, 0.0
        %v1788 = vmax.f32 %v1341, 0.0
        %v1789 = vmax.f32 %v1343, 0.0
        %v1790 = vmax.f32 %v1454, 0.0
        %v1791 = vmax.f32 %v1456, 0.0
        %v1792 = vmax.f32 %v1567, 0.0
        %v1793 = vmax.f32 %v1569, 0.0
        %v1794 = vmax.f32 %v1680, 0.0
        %v1795 = vmax.f32 %v1682, 0.0
        %v1796 = vmax.f32 %v1345, 0.0
        %v1797 = vmax.f32 %v1347, 0.0
        %v1798 = vmax.f32 %v1458, 0.0
        %v1799 = vmax.f32 %v1460, 0.0
        %v1800 = vmax.f32 %v1571, 0.0
        %v1801 = vmax.f32 %v1573, 0.0
        %v1802 = vmax.f32 %v1684, 0.0
        %v1803 = vmax.f32 %v1686, 0.0
        %v1804 = vmax.f32 %v1351, 0.0
        %v1805 = vmax.f32 %v1353, 0.0
        %v1806 = vmax.f32 %v1464, 0.0
        %v1807 = vmax.f32 %v1466, 0.0
        %v1808 = vmax.f32 %v1577, 0.0
        %v1809 = vmax.f32 %v1579, 0.0
        %v1810 = vmax.f32 %v1690, 0.0
        %v1811 = vmax.f32 %v1692, 0.0
        %v1812 = vmax.f32 %v1355, 0.0
        %v1813 = vmax.f32 %v1357, 0.0
        %v1814 = vmax.f32 %v1468, 0.0
        %v1815 = vmax.f32 %v1470, 0.0
        %v1816 = vmax.f32 %v1581, 0.0
        %v1817 = vmax.f32 %v1583, 0.0
        %v1818 = vmax.f32 %v1694, 0.0
        %v1819 = vmax.f32 %v1696, 0.0
        %v1820 = vmax.f32 %v1361, 0.0
        %v1821 = vmax.f32 %v1363, 0.0
        %v1822 = vmax.f32 %v1474, 0.0
        %v1823 = vmax.f32 %v1476, 0.0
        %v1824 = vmax.f32 %v1587, 0.0
        %v1825 = vmax.f32 %v1589, 0.0
        %v1826 = vmax.f32 %v1700, 0.0
        %v1827 = vmax.f32 %v1702, 0.0
        %v1828 = vmax.f32 %v1365, 0.0
        %v1829 = vmax.f32 %v1367, 0.0
        %v1830 = vmax.f32 %v1478, 0.0
        %v1831 = vmax.f32 %v1480, 0.0
        %v1832 = vmax.f32 %v1591, 0.0
        %v1833 = vmax.f32 %v1593, 0.0
        %v1834 = vmax.f32 %v1704, 0.0
        %v1835 = vmax.f32 %v1706, 0.0
        %v1836 = vld [vmem:[%s4] sm:$0xf]
        %v1837 = vld [vmem:[%s4 + $0x4] sm:$0xf]
        %v1838 = vld [vmem:[%s4 + $0x8] sm:$0xf]
        %v1839 = vld [vmem:[%s4 + $0xc] sm:$0xf]
        %v1840 = vld [vmem:[%s4 + $0x10] sm:$0xf]
        %v1841 = vld [vmem:[%s4 + $0x14] sm:$0xf]
        %v1842 = vld [vmem:[%s4 + $0x18] sm:$0xf]
        %v1843 = vld [vmem:[%s4 + $0x1c] sm:$0xf]
        %v1844 = vld [vmem:[%s4 + $0x20] sm:$0xf]
        %v1845 = vld [vmem:[%s4 + $0x24] sm:$0xf]
        %v1846 = vld [vmem:[%s4 + $0x28] sm:$0xf]
        %v1847 = vld [vmem:[%s4 + $0x2c] sm:$0xf]
        %v1848 = vld [vmem:[%s4 + $0x30] sm:$0xf]
        %v1849 = vld [vmem:[%s4 + $0x34] sm:$0xf]
        %v1850 = vld [vmem:[%s4 + $0x38] sm:$0xf]
        %v1851 = vld [vmem:[%s4 + $0x3c] sm:$0xf]
        %v1852 = vpack.c.bf16 %v1716, %v1708
        %v1853 = vpack.c.bf16 %v1717, %v1709
        %v1854 = vpack.c.bf16 %v1718, %v1710
        %v1855 = vpack.c.bf16 %v1719, %v1711
        %v1856 = vpack.c.bf16 %v1720, %v1712
        %v1857 = vpack.c.bf16 %v1721, %v1713
        %v1858 = vpack.c.bf16 %v1722, %v1714
        %v1859 = vpack.c.bf16 %v1723, %v1715
        %v1860 = vpack.c.bf16 %v1732, %v1724
        %v1861 = vpack.c.bf16 %v1733, %v1725
        %v1862 = vpack.c.bf16 %v1734, %v1726
        %v1863 = vpack.c.bf16 %v1735, %v1727
        %v1864 = vpack.c.bf16 %v1736, %v1728
        %v1865 = vpack.c.bf16 %v1737, %v1729
        %v1866 = vpack.c.bf16 %v1738, %v1730
        %v1867 = vpack.c.bf16 %v1739, %v1731
        %v1868 = vpack.c.bf16 %v1748, %v1740
        %v1869 = vpack.c.bf16 %v1749, %v1741
        %v1870 = vpack.c.bf16 %v1750, %v1742
        %v1871 = vpack.c.bf16 %v1751, %v1743
        %v1872 = vpack.c.bf16 %v1752, %v1744
        %v1873 = vpack.c.bf16 %v1753, %v1745
        %v1874 = vpack.c.bf16 %v1754, %v1746
        %v1875 = vpack.c.bf16 %v1755, %v1747
        %v1876 = vpack.c.bf16 %v1764, %v1756
        %v1877 = vpack.c.bf16 %v1765, %v1757
        %v1878 = vpack.c.bf16 %v1766, %v1758
        %v1879 = vpack.c.bf16 %v1767, %v1759
        %v1880 = vpack.c.bf16 %v1768, %v1760
        %v1881 = vpack.c.bf16 %v1769, %v1761
        %v1882 = vpack.c.bf16 %v1770, %v1762
        %v1883 = vpack.c.bf16 %v1771, %v1763
        %v1884 = vpack.c.bf16 %v1780, %v1772
        %v1885 = vpack.c.bf16 %v1781, %v1773
        %v1886 = vpack.c.bf16 %v1782, %v1774
        %v1887 = vpack.c.bf16 %v1783, %v1775
        %v1888 = vpack.c.bf16 %v1784, %v1776
        %v1889 = vpack.c.bf16 %v1785, %v1777
        %v1890 = vpack.c.bf16 %v1786, %v1778
        %v1891 = vpack.c.bf16 %v1787, %v1779
        %v1892 = vpack.c.bf16 %v1796, %v1788
        %v1893 = vpack.c.bf16 %v1797, %v1789
        %v1894 = vpack.c.bf16 %v1798, %v1790
        %v1895 = vpack.c.bf16 %v1799, %v1791
        %v1896 = vpack.c.bf16 %v1800, %v1792
        %v1897 = vpack.c.bf16 %v1801, %v1793
        %v1898 = vpack.c.bf16 %v1802, %v1794
        %v1899 = vpack.c.bf16 %v1803, %v1795
        %v1900 = vpack.c.bf16 %v1812, %v1804
        %v1901 = vpack.c.bf16 %v1813, %v1805
        %v1902 = vpack.c.bf16 %v1814, %v1806
        %v1903 = vpack.c.bf16 %v1815, %v1807
        %v1904 = vpack.c.bf16 %v1816, %v1808
        %v1905 = vpack.c.bf16 %v1817, %v1809
        %v1906 = vpack.c.bf16 %v1818, %v1810
        %v1907 = vpack.c.bf16 %v1819, %v1811
        %v1908 = vpack.c.bf16 %v1828, %v1820
        %v1909 = vpack.c.bf16 %v1829, %v1821
        %v1910 = vpack.c.bf16 %v1830, %v1822
        %v1911 = vpack.c.bf16 %v1831, %v1823
        %v1912 = vpack.c.bf16 %v1832, %v1824
        %v1913 = vpack.c.bf16 %v1833, %v1825
        %v1914 = vpack.c.bf16 %v1834, %v1826
        %v1915 = vpack.c.bf16 %v1835, %v1827
        %v1916 = vld [vmem:[%s5] sm:$0xff]
        %v1917 = vld [vmem:[%s5 + $0x8] sm:$0xff]
        %v1918 = vld [vmem:[%s5 + $0x10] sm:$0xff]
        %v1919 = vld [vmem:[%s5 + $0x18] sm:$0xff]
        %v1920 = vld [vmem:[%s5 + $0x20] sm:$0xff]
        %v1921 = vld [vmem:[%s5 + $0x28] sm:$0xff]
        %v1922 = vld [vmem:[%s5 + $0x30] sm:$0xff]
        %v1923 = vld [vmem:[%s5 + $0x38] sm:$0xff]
        %v1924 = vld [vmem:[%s5 + $0x40] sm:$0xff]
        %v1925 = vld [vmem:[%s5 + $0x48] sm:$0xff]
        %v1926 = vld [vmem:[%s5 + $0x50] sm:$0xff]
        %v1927 = vld [vmem:[%s5 + $0x58] sm:$0xff]
        %v1928 = vld [vmem:[%s5 + $0x60] sm:$0xff]
        %v1929 = vld [vmem:[%s5 + $0x68] sm:$0xff]
        %v1930 = vld [vmem:[%s5 + $0x70] sm:$0xff]
        %v1931 = vld [vmem:[%s5 + $0x78] sm:$0xff]
        %1933 = vset.pattern.permute.xlu0 0
        %1934 = vperm.xlu0 %1933, %v1916
        %v1935 = vpop.permute.xlu0 %1934
        %1938 = vset.pattern.permute.xlu0 0
        %1939 = vperm.xlu0 %1938, %v1917
        %v1940 = vpop.permute.xlu0 %1939
        %1943 = vset.pattern.permute.xlu0 0
        %1944 = vperm.xlu0 %1943, %v1918
        %v1945 = vpop.permute.xlu0 %1944
        %1948 = vset.pattern.permute.xlu0 0
        %1949 = vperm.xlu0 %1948, %v1919
        %v1950 = vpop.permute.xlu0 %1949
        %1953 = vset.pattern.permute.xlu0 0
        %1954 = vperm.xlu0 %1953, %v1920
        %v1955 = vpop.permute.xlu0 %1954
        %1958 = vset.pattern.permute.xlu0 0
        %1959 = vperm.xlu0 %1958, %v1921
        %v1960 = vpop.permute.xlu0 %1959
        %1963 = vset.pattern.permute.xlu0 0
        %1964 = vperm.xlu0 %1963, %v1922
        %v1965 = vpop.permute.xlu0 %1964
        %1968 = vset.pattern.permute.xlu0 0
        %1969 = vperm.xlu0 %1968, %v1923
        %v1970 = vpop.permute.xlu0 %1969
        %1973 = vset.pattern.permute.xlu0 0
        %1974 = vperm.xlu0 %1973, %v1924
        %v1975 = vpop.permute.xlu0 %1974
        %1978 = vset.pattern.permute.xlu0 0
        %1979 = vperm.xlu0 %1978, %v1925
        %v1980 = vpop.permute.xlu0 %1979
        %1983 = vset.pattern.permute.xlu0 0
        %1984 = vperm.xlu0 %1983, %v1926
        %v1985 = vpop.permute.xlu0 %1984
        %1988 = vset.pattern.permute.xlu0 0
        %1989 = vperm.xlu0 %1988, %v1927
        %v1990 = vpop.permute.xlu0 %1989
        %1993 = vset.pattern.permute.xlu0 0
        %1994 = vperm.xlu0 %1993, %v1928
        %v1995 = vpop.permute.xlu0 %1994
        %1998 = vset.pattern.permute.xlu0 0
        %1999 = vperm.xlu0 %1998, %v1929
        %v2000 = vpop.permute.xlu0 %1999
        %2003 = vset.pattern.permute.xlu0 0
        %2004 = vperm.xlu0 %2003, %v1930
        %v2005 = vpop.permute.xlu0 %2004
        %2008 = vset.pattern.permute.xlu0 0
        %2009 = vperm.xlu0 %2008, %v1931
        %v2010 = vpop.permute.xlu0 %2009
        %v2028 = vunpack.c.l.b16 %v1836
        %v2029 = vunpack.c.l.b16 %v1837
        %v2030 = vunpack.c.l.b16 %v1838
        %v2031 = vunpack.c.l.b16 %v1839
        %v2032 = vunpack.c.l.b16 %v1840
        %v2033 = vunpack.c.l.b16 %v1841
        %v2034 = vunpack.c.l.b16 %v1842
        %v2035 = vunpack.c.l.b16 %v1843
        %v2036 = vunpack.c.l.b16 %v1844
        %v2037 = vunpack.c.l.b16 %v1845
        %v2038 = vunpack.c.l.b16 %v1846
        %v2039 = vunpack.c.l.b16 %v1847
        %v2040 = vunpack.c.l.b16 %v1848
        %v2041 = vunpack.c.l.b16 %v1849
        %v2042 = vunpack.c.l.b16 %v1850
        %v2043 = vunpack.c.l.b16 %v1851
        %v2044 = vpack.c.b16 %v2029, %v2028
        %v2045 = vpack.c.b16 %v2031, %v2030
        %v2046 = vpack.c.b16 %v2033, %v2032
        %v2047 = vpack.c.b16 %v2035, %v2034
        %v2048 = vpack.c.b16 %v2037, %v2036
        %v2049 = vpack.c.b16 %v2039, %v2038
        %v2050 = vpack.c.b16 %v2041, %v2040
        %v2051 = vpack.c.b16 %v2043, %v2042
        %2060 = vmatprep.subr.bf16.mxu0 %v1909
        %2061 = vmatpush1.bf16.msra.mxu0 %v1908
        %2062 = vmatprep.subr.bf16.mxu0 %v1901
        %2063 = vmatpush1.bf16.msra.mxu0 %v1900
        %2064 = vmatprep.subr.bf16.mxu0 %v1893
        %2065 = vmatpush1.bf16.msra.mxu0 %v1892
        %2066 = vmatprep.subr.bf16.mxu0 %v1885
        %2067 = vmatpush1.bf16.msra.mxu0 %v1884
        %2068 = vmatprep.subr.bf16.mxu0 %v1877
        %2069 = vmatpush1.bf16.msra.mxu0 %v1876
        %2070 = vmatprep.subr.bf16.mxu0 %v1869
        %2071 = vmatpush1.bf16.msra.mxu0 %v1868
        %2072 = vmatprep.subr.bf16.mxu0 %v1861
        %2073 = vmatpush1.bf16.msra.mxu0 %v1860
        %2074 = vmatprep.subr.bf16.mxu0 %v1853
        %2075 = vmatpush1.bf16.msra.mxu0 %v1852
        %2076 = vmatprep.subr.bf16.mxu0 0
        %2077 = vmatpush2.bf16.msra.mxu0 0
        %2078 = vmatprep.subr.bf16.mxu0 0
        %2079 = vmatpush2.bf16.msra.mxu0 0
        %2080 = vmatprep.subr.bf16.mxu0 0
        %2081 = vmatpush2.bf16.msra.mxu0 0
        %2082 = vmatprep.subr.bf16.mxu0 0
        %2083 = vmatpush2.bf16.msra.mxu0 0
        %2084 = vmatprep.subr.bf16.mxu0 0
        %2085 = vmatpush2.bf16.msra.mxu0 0
        %2086 = vmatprep.subr.bf16.mxu0 0
        %2087 = vmatpush2.bf16.msra.mxu0 0
        %2088 = vmatprep.subr.bf16.mxu0 0
        %2089 = vmatpush2.bf16.msra.mxu0 0
        %2090 = vmatprep.subr.bf16.mxu0 0
        %2091 = vmatpush2.bf16.msra.mxu0 0
        %2092 = vmatprep.mubr.bf16.mxu0 0
        %2093 = vmatmul.mubr.bf16.gmra.mxu0 %v2044
        %v2094 = vpop.f32.mrf.mxu0
        %v2095 = vadd.f32 %v1935, %v2094
        %v2096 = vpop.f32.mrf.mxu0
        %v2097 = vadd.f32 %v1935, %v2096
        %v2098 = vpop.f32.mrf.mxu0
        %v2099 = vadd.f32 %v1940, %v2098
        %v2100 = vpop.f32.mrf.mxu0
        %v2101 = vadd.f32 %v1940, %v2100
        %2102 = vmatprep.mubr.bf16.mxu0 0
        %2103 = vmatmul.mubr.bf16.gmra.mxu0 %v2045
        %v2104 = vpop.f32.mrf.mxu0
        %v2105 = vadd.f32 %v1945, %v2104
        %v2106 = vpop.f32.mrf.mxu0
        %v2107 = vadd.f32 %v1945, %v2106
        %v2108 = vpop.f32.mrf.mxu0
        %v2109 = vadd.f32 %v1950, %v2108
        %v2110 = vpop.f32.mrf.mxu0
        %v2111 = vadd.f32 %v1950, %v2110
        %2112 = vmatprep.mubr.bf16.mxu0 0
        %2113 = vmatmul.mubr.bf16.gmra.mxu0 %v2046
        %v2114 = vpop.f32.mrf.mxu0
        %v2115 = vadd.f32 %v1955, %v2114
        %v2116 = vpop.f32.mrf.mxu0
        %v2117 = vadd.f32 %v1955, %v2116
        %v2118 = vpop.f32.mrf.mxu0
        %v2119 = vadd.f32 %v1960, %v2118
        %v2120 = vpop.f32.mrf.mxu0
        %v2121 = vadd.f32 %v1960, %v2120
        %2122 = vmatprep.mubr.bf16.mxu0 0
        %2123 = vmatmul.mubr.bf16.gmra.mxu0 %v2047
        %v2124 = vpop.f32.mrf.mxu0
        %v2125 = vadd.f32 %v1965, %v2124
        %v2126 = vpop.f32.mrf.mxu0
        %v2127 = vadd.f32 %v1965, %v2126
        %v2128 = vpop.f32.mrf.mxu0
        %v2129 = vadd.f32 %v1970, %v2128
        %v2130 = vpop.f32.mrf.mxu0
        %v2131 = vadd.f32 %v1970, %v2130
        %2132 = vmatprep.mubr.bf16.mxu0 0
        %2133 = vmatmul.mubr.bf16.gmra.mxu0 %v2048
        %v2134 = vpop.f32.mrf.mxu0
        %v2135 = vadd.f32 %v1975, %v2134
        %v2136 = vpop.f32.mrf.mxu0
        %v2137 = vadd.f32 %v1975, %v2136
        %v2138 = vpop.f32.mrf.mxu0
        %v2139 = vadd.f32 %v1980, %v2138
        %v2140 = vpop.f32.mrf.mxu0
        %v2141 = vadd.f32 %v1980, %v2140
        %2142 = vmatprep.mubr.bf16.mxu0 0
        %2143 = vmatmul.mubr.bf16.gmra.mxu0 %v2049
        %v2144 = vpop.f32.mrf.mxu0
        %v2145 = vadd.f32 %v1985, %v2144
        %v2146 = vpop.f32.mrf.mxu0
        %v2147 = vadd.f32 %v1985, %v2146
        %v2148 = vpop.f32.mrf.mxu0
        %v2149 = vadd.f32 %v1990, %v2148
        %v2150 = vpop.f32.mrf.mxu0
        %v2151 = vadd.f32 %v1990, %v2150
        %2152 = vmatprep.mubr.bf16.mxu0 0
        %2153 = vmatmul.mubr.bf16.gmra.mxu0 %v2050
        %v2154 = vpop.f32.mrf.mxu0
        %v2155 = vadd.f32 %v1995, %v2154
        %v2156 = vpop.f32.mrf.mxu0
        %v2157 = vadd.f32 %v1995, %v2156
        %v2158 = vpop.f32.mrf.mxu0
        %v2159 = vadd.f32 %v2000, %v2158
        %v2160 = vpop.f32.mrf.mxu0
        %v2161 = vadd.f32 %v2000, %v2160
        %2162 = vmatprep.mubr.bf16.mxu0 0
        %2163 = vmatmul.mubr.bf16.gmra.mxu0 %v2051
        %v2164 = vpop.f32.mrf.mxu0
        %v2165 = vadd.f32 %v2005, %v2164
        %v2166 = vpop.f32.mrf.mxu0
        %v2167 = vadd.f32 %v2005, %v2166
        %v2168 = vpop.f32.mrf.mxu0
        %v2169 = vadd.f32 %v2010, %v2168
        %v2170 = vpop.f32.mrf.mxu0
        %v2171 = vadd.f32 %v2010, %v2170
        %2172 = vdwg.mxu0
        %2173 = vmatprep.subr.bf16.mxu0 %v1911
        %2174 = vmatpush1.bf16.msra.mxu0 %v1910
        %2175 = vmatprep.subr.bf16.mxu0 %v1903
        %2176 = vmatpush1.bf16.msra.mxu0 %v1902
        %2177 = vmatprep.subr.bf16.mxu0 %v1895
        %2178 = vmatpush1.bf16.msra.mxu0 %v1894
        %2179 = vmatprep.subr.bf16.mxu0 %v1887
        %2180 = vmatpush1.bf16.msra.mxu0 %v1886
        %2181 = vmatprep.subr.bf16.mxu0 %v1879
        %2182 = vmatpush1.bf16.msra.mxu0 %v1878
        %2183 = vmatprep.subr.bf16.mxu0 %v1871
        %2184 = vmatpush1.bf16.msra.mxu0 %v1870
        %2185 = vmatprep.subr.bf16.mxu0 %v1863
        %2186 = vmatpush1.bf16.msra.mxu0 %v1862
        %2187 = vmatprep.subr.bf16.mxu0 %v1855
        %2188 = vmatpush1.bf16.msra.mxu0 %v1854
        %2189 = vmatprep.subr.bf16.mxu0 0
        %2190 = vmatpush2.bf16.msra.mxu0 0
        %2191 = vmatprep.subr.bf16.mxu0 0
        %2192 = vmatpush2.bf16.msra.mxu0 0
        %2193 = vmatprep.subr.bf16.mxu0 0
        %2194 = vmatpush2.bf16.msra.mxu0 0
        %2195 = vmatprep.subr.bf16.mxu0 0
        %2196 = vmatpush2.bf16.msra.mxu0 0
        %2197 = vmatprep.subr.bf16.mxu0 0
        %2198 = vmatpush2.bf16.msra.mxu0 0
        %2199 = vmatprep.subr.bf16.mxu0 0
        %2200 = vmatpush2.bf16.msra.mxu0 0
        %2201 = vmatprep.subr.bf16.mxu0 0
        %2202 = vmatpush2.bf16.msra.mxu0 0
        %2203 = vmatprep.subr.bf16.mxu0 0
        %2204 = vmatpush2.bf16.msra.mxu0 0
        %2205 = vmatprep.mubr.bf16.mxu0 0
        %2206 = vmatmul.mubr.bf16.gmra.mxu0 %v2044
        %v2207 = vpop.f32.mrf.mxu0
        %v2208 = vadd.f32 %v1935, %v2207
        %v2209 = vpop.f32.mrf.mxu0
        %v2210 = vadd.f32 %v1935, %v2209
        %v2211 = vpop.f32.mrf.mxu0
        %v2212 = vadd.f32 %v1940, %v2211
        %v2213 = vpop.f32.mrf.mxu0
        %v2214 = vadd.f32 %v1940, %v2213
        %2215 = vmatprep.mubr.bf16.mxu0 0
        %2216 = vmatmul.mubr.bf16.gmra.mxu0 %v2045
        %v2217 = vpop.f32.mrf.mxu0
        %v2218 = vadd.f32 %v1945, %v2217
        %v2219 = vpop.f32.mrf.mxu0
        %v2220 = vadd.f32 %v1945, %v2219
        %v2221 = vpop.f32.mrf.mxu0
        %v2222 = vadd.f32 %v1950, %v2221
        %v2223 = vpop.f32.mrf.mxu0
        %v2224 = vadd.f32 %v1950, %v2223
        %2225 = vmatprep.mubr.bf16.mxu0 0
        %2226 = vmatmul.mubr.bf16.gmra.mxu0 %v2046
        %v2227 = vpop.f32.mrf.mxu0
        %v2228 = vadd.f32 %v1955, %v2227
        %v2229 = vpop.f32.mrf.mxu0
        %v2230 = vadd.f32 %v1955, %v2229
        %v2231 = vpop.f32.mrf.mxu0
        %v2232 = vadd.f32 %v1960, %v2231
        %v2233 = vpop.f32.mrf.mxu0
        %v2234 = vadd.f32 %v1960, %v2233
        %2235 = vmatprep.mubr.bf16.mxu0 0
        %2236 = vmatmul.mubr.bf16.gmra.mxu0 %v2047
        %v2237 = vpop.f32.mrf.mxu0
        %v2238 = vadd.f32 %v1965, %v2237
        %v2239 = vpop.f32.mrf.mxu0
        %v2240 = vadd.f32 %v1965, %v2239
        %v2241 = vpop.f32.mrf.mxu0
        %v2242 = vadd.f32 %v1970, %v2241
        %v2243 = vpop.f32.mrf.mxu0
        %v2244 = vadd.f32 %v1970, %v2243
        %2245 = vmatprep.mubr.bf16.mxu0 0
        %2246 = vmatmul.mubr.bf16.gmra.mxu0 %v2048
        %v2247 = vpop.f32.mrf.mxu0
        %v2248 = vadd.f32 %v1975, %v2247
        %v2249 = vpop.f32.mrf.mxu0
        %v2250 = vadd.f32 %v1975, %v2249
        %v2251 = vpop.f32.mrf.mxu0
        %v2252 = vadd.f32 %v1980, %v2251
        %v2253 = vpop.f32.mrf.mxu0
        %v2254 = vadd.f32 %v1980, %v2253
        %2255 = vmatprep.mubr.bf16.mxu0 0
        %2256 = vmatmul.mubr.bf16.gmra.mxu0 %v2049
        %v2257 = vpop.f32.mrf.mxu0
        %v2258 = vadd.f32 %v1985, %v2257
        %v2259 = vpop.f32.mrf.mxu0
        %v2260 = vadd.f32 %v1985, %v2259
        %v2261 = vpop.f32.mrf.mxu0
        %v2262 = vadd.f32 %v1990, %v2261
        %v2263 = vpop.f32.mrf.mxu0
        %v2264 = vadd.f32 %v1990, %v2263
        %2265 = vmatprep.mubr.bf16.mxu0 0
        %2266 = vmatmul.mubr.bf16.gmra.mxu0 %v2050
        %v2267 = vpop.f32.mrf.mxu0
        %v2268 = vadd.f32 %v1995, %v2267
        %v2269 = vpop.f32.mrf.mxu0
        %v2270 = vadd.f32 %v1995, %v2269
        %v2271 = vpop.f32.mrf.mxu0
        %v2272 = vadd.f32 %v2000, %v2271
        %v2273 = vpop.f32.mrf.mxu0
        %v2274 = vadd.f32 %v2000, %v2273
        %2275 = vmatprep.mubr.bf16.mxu0 0
        %2276 = vmatmul.mubr.bf16.gmra.mxu0 %v2051
        %v2277 = vpop.f32.mrf.mxu0
        %v2278 = vadd.f32 %v2005, %v2277
        %v2279 = vpop.f32.mrf.mxu0
        %v2280 = vadd.f32 %v2005, %v2279
        %v2281 = vpop.f32.mrf.mxu0
        %v2282 = vadd.f32 %v2010, %v2281
        %v2283 = vpop.f32.mrf.mxu0
        %v2284 = vadd.f32 %v2010, %v2283
        %2285 = vdwg.mxu0
        %2286 = vmatprep.subr.bf16.mxu0 %v1913
        %2287 = vmatpush1.bf16.msra.mxu0 %v1912
        %2288 = vmatprep.subr.bf16.mxu0 %v1905
        %2289 = vmatpush1.bf16.msra.mxu0 %v1904
        %2290 = vmatprep.subr.bf16.mxu0 %v1897
        %2291 = vmatpush1.bf16.msra.mxu0 %v1896
        %2292 = vmatprep.subr.bf16.mxu0 %v1889
        %2293 = vmatpush1.bf16.msra.mxu0 %v1888
        %2294 = vmatprep.subr.bf16.mxu0 %v1881
        %2295 = vmatpush1.bf16.msra.mxu0 %v1880
        %2296 = vmatprep.subr.bf16.mxu0 %v1873
        %2297 = vmatpush1.bf16.msra.mxu0 %v1872
        %2298 = vmatprep.subr.bf16.mxu0 %v1865
        %2299 = vmatpush1.bf16.msra.mxu0 %v1864
        %2300 = vmatprep.subr.bf16.mxu0 %v1857
        %2301 = vmatpush1.bf16.msra.mxu0 %v1856
        %2302 = vmatprep.subr.bf16.mxu0 0
        %2303 = vmatpush2.bf16.msra.mxu0 0
        %2304 = vmatprep.subr.bf16.mxu0 0
        %2305 = vmatpush2.bf16.msra.mxu0 0
        %2306 = vmatprep.subr.bf16.mxu0 0
        %2307 = vmatpush2.bf16.msra.mxu0 0
        %2308 = vmatprep.subr.bf16.mxu0 0
        %2309 = vmatpush2.bf16.msra.mxu0 0
        %2310 = vmatprep.subr.bf16.mxu0 0
        %2311 = vmatpush2.bf16.msra.mxu0 0
        %2312 = vmatprep.subr.bf16.mxu0 0
        %2313 = vmatpush2.bf16.msra.mxu0 0
        %2314 = vmatprep.subr.bf16.mxu0 0
        %2315 = vmatpush2.bf16.msra.mxu0 0
        %2316 = vmatprep.subr.bf16.mxu0 0
        %2317 = vmatpush2.bf16.msra.mxu0 0
        %2318 = vmatprep.mubr.bf16.mxu0 0
        %2319 = vmatmul.mubr.bf16.gmra.mxu0 %v2044
        %v2320 = vpop.f32.mrf.mxu0
        %v2321 = vadd.f32 %v1935, %v2320
        %v2322 = vpop.f32.mrf.mxu0
        %v2323 = vadd.f32 %v1935, %v2322
        %v2324 = vpop.f32.mrf.mxu0
        %v2325 = vadd.f32 %v1940, %v2324
        %v2326 = vpop.f32.mrf.mxu0
        %v2327 = vadd.f32 %v1940, %v2326
        %2328 = vmatprep.mubr.bf16.mxu0 0
        %2329 = vmatmul.mubr.bf16.gmra.mxu0 %v2045
        %v2330 = vpop.f32.mrf.mxu0
        %v2331 = vadd.f32 %v1945, %v2330
        %v2332 = vpop.f32.mrf.mxu0
        %v2333 = vadd.f32 %v1945, %v2332
        %v2334 = vpop.f32.mrf.mxu0
        %v2335 = vadd.f32 %v1950, %v2334
        %v2336 = vpop.f32.mrf.mxu0
        %v2337 = vadd.f32 %v1950, %v2336
        %2338 = vmatprep.mubr.bf16.mxu0 0
        %2339 = vmatmul.mubr.bf16.gmra.mxu0 %v2046
        %v2340 = vpop.f32.mrf.mxu0
        %v2341 = vadd.f32 %v1955, %v2340
        %v2342 = vpop.f32.mrf.mxu0
        %v2343 = vadd.f32 %v1955, %v2342
        %v2344 = vpop.f32.mrf.mxu0
        %v2345 = vadd.f32 %v1960, %v2344
        %v2346 = vpop.f32.mrf.mxu0
        %v2347 = vadd.f32 %v1960, %v2346
        %2348 = vmatprep.mubr.bf16.mxu0 0
        %2349 = vmatmul.mubr.bf16.gmra.mxu0 %v2047
        %v2350 = vpop.f32.mrf.mxu0
        %v2351 = vadd.f32 %v1965, %v2350
        %v2352 = vpop.f32.mrf.mxu0
        %v2353 = vadd.f32 %v1965, %v2352
        %v2354 = vpop.f32.mrf.mxu0
        %v2355 = vadd.f32 %v1970, %v2354
        %v2356 = vpop.f32.mrf.mxu0
        %v2357 = vadd.f32 %v1970, %v2356
        %2358 = vmatprep.mubr.bf16.mxu0 0
        %2359 = vmatmul.mubr.bf16.gmra.mxu0 %v2048
        %v2360 = vpop.f32.mrf.mxu0
        %v2361 = vadd.f32 %v1975, %v2360
        %v2362 = vpop.f32.mrf.mxu0
        %v2363 = vadd.f32 %v1975, %v2362
        %v2364 = vpop.f32.mrf.mxu0
        %v2365 = vadd.f32 %v1980, %v2364
        %v2366 = vpop.f32.mrf.mxu0
        %v2367 = vadd.f32 %v1980, %v2366
        %2368 = vmatprep.mubr.bf16.mxu0 0
        %2369 = vmatmul.mubr.bf16.gmra.mxu0 %v2049
        %v2370 = vpop.f32.mrf.mxu0
        %v2371 = vadd.f32 %v1985, %v2370
        %v2372 = vpop.f32.mrf.mxu0
        %v2373 = vadd.f32 %v1985, %v2372
        %v2374 = vpop.f32.mrf.mxu0
        %v2375 = vadd.f32 %v1990, %v2374
        %v2376 = vpop.f32.mrf.mxu0
        %v2377 = vadd.f32 %v1990, %v2376
        %2378 = vmatprep.mubr.bf16.mxu0 0
        %2379 = vmatmul.mubr.bf16.gmra.mxu0 %v2050
        %v2380 = vpop.f32.mrf.mxu0
        %v2381 = vadd.f32 %v1995, %v2380
        %v2382 = vpop.f32.mrf.mxu0
        %v2383 = vadd.f32 %v1995, %v2382
        %v2384 = vpop.f32.mrf.mxu0
        %v2385 = vadd.f32 %v2000, %v2384
        %v2386 = vpop.f32.mrf.mxu0
        %v2387 = vadd.f32 %v2000, %v2386
        %2388 = vmatprep.mubr.bf16.mxu0 0
        %2389 = vmatmul.mubr.bf16.gmra.mxu0 %v2051
        %v2390 = vpop.f32.mrf.mxu0
        %v2391 = vadd.f32 %v2005, %v2390
        %v2392 = vpop.f32.mrf.mxu0
        %v2393 = vadd.f32 %v2005, %v2392
        %v2394 = vpop.f32.mrf.mxu0
        %v2395 = vadd.f32 %v2010, %v2394
        %v2396 = vpop.f32.mrf.mxu0
        %v2397 = vadd.f32 %v2010, %v2396
        %2398 = vdwg.mxu0
        %2399 = vmatprep.subr.bf16.mxu0 %v1915
        %2400 = vmatpush1.bf16.msra.mxu0 %v1914
        %2401 = vmatprep.subr.bf16.mxu0 %v1907
        %2402 = vmatpush1.bf16.msra.mxu0 %v1906
        %2403 = vmatprep.subr.bf16.mxu0 %v1899
        %2404 = vmatpush1.bf16.msra.mxu0 %v1898
        %2405 = vmatprep.subr.bf16.mxu0 %v1891
        %2406 = vmatpush1.bf16.msra.mxu0 %v1890
        %2407 = vmatprep.subr.bf16.mxu0 %v1883
        %2408 = vmatpush1.bf16.msra.mxu0 %v1882
        %2409 = vmatprep.subr.bf16.mxu0 %v1875
        %2410 = vmatpush1.bf16.msra.mxu0 %v1874
        %2411 = vmatprep.subr.bf16.mxu0 %v1867
        %2412 = vmatpush1.bf16.msra.mxu0 %v1866
        %2413 = vmatprep.subr.bf16.mxu0 %v1859
        %2414 = vmatpush1.bf16.msra.mxu0 %v1858
        %2415 = vmatprep.subr.bf16.mxu0 0
        %2416 = vmatpush2.bf16.msra.mxu0 0
        %2417 = vmatprep.subr.bf16.mxu0 0
        %2418 = vmatpush2.bf16.msra.mxu0 0
        %2419 = vmatprep.subr.bf16.mxu0 0
        %2420 = vmatpush2.bf16.msra.mxu0 0
        %2421 = vmatprep.subr.bf16.mxu0 0
        %2422 = vmatpush2.bf16.msra.mxu0 0
        %2423 = vmatprep.subr.bf16.mxu0 0
        %2424 = vmatpush2.bf16.msra.mxu0 0
        %2425 = vmatprep.subr.bf16.mxu0 0
        %2426 = vmatpush2.bf16.msra.mxu0 0
        %2427 = vmatprep.subr.bf16.mxu0 0
        %2428 = vmatpush2.bf16.msra.mxu0 0
        %2429 = vmatprep.subr.bf16.mxu0 0
        %2430 = vmatpush2.bf16.msra.mxu0 0
        %2431 = vmatprep.mubr.bf16.mxu0 0
        %2432 = vmatmul.mubr.bf16.gmra.mxu0 %v2044
        %v2433 = vpop.f32.mrf.mxu0
        %v2434 = vadd.f32 %v1935, %v2433
        %v2435 = vpop.f32.mrf.mxu0
        %v2436 = vadd.f32 %v1935, %v2435
        %v2437 = vpop.f32.mrf.mxu0
        %v2438 = vadd.f32 %v1940, %v2437
        %v2439 = vpop.f32.mrf.mxu0
        %v2440 = vadd.f32 %v1940, %v2439
        %2441 = vmatprep.mubr.bf16.mxu0 0
        %2442 = vmatmul.mubr.bf16.gmra.mxu0 %v2045
        %v2443 = vpop.f32.mrf.mxu0
        %v2444 = vadd.f32 %v1945, %v2443
        %v2445 = vpop.f32.mrf.mxu0
        %v2446 = vadd.f32 %v1945, %v2445
        %v2447 = vpop.f32.mrf.mxu0
        %v2448 = vadd.f32 %v1950, %v2447
        %v2449 = vpop.f32.mrf.mxu0
        %v2450 = vadd.f32 %v1950, %v2449
        %2451 = vmatprep.mubr.bf16.mxu0 0
        %2452 = vmatmul.mubr.bf16.gmra.mxu0 %v2046
        %v2453 = vpop.f32.mrf.mxu0
        %v2454 = vadd.f32 %v1955, %v2453
        %v2455 = vpop.f32.mrf.mxu0
        %v2456 = vadd.f32 %v1955, %v2455
        %v2457 = vpop.f32.mrf.mxu0
        %v2458 = vadd.f32 %v1960, %v2457
        %v2459 = vpop.f32.mrf.mxu0
        %v2460 = vadd.f32 %v1960, %v2459
        %2461 = vmatprep.mubr.bf16.mxu0 0
        %2462 = vmatmul.mubr.bf16.gmra.mxu0 %v2047
        %v2463 = vpop.f32.mrf.mxu0
        %v2464 = vadd.f32 %v1965, %v2463
        %v2465 = vpop.f32.mrf.mxu0
        %v2466 = vadd.f32 %v1965, %v2465
        %v2467 = vpop.f32.mrf.mxu0
        %v2468 = vadd.f32 %v1970, %v2467
        %v2469 = vpop.f32.mrf.mxu0
        %v2470 = vadd.f32 %v1970, %v2469
        %2471 = vmatprep.mubr.bf16.mxu0 0
        %2472 = vmatmul.mubr.bf16.gmra.mxu0 %v2048
        %v2473 = vpop.f32.mrf.mxu0
        %v2474 = vadd.f32 %v1975, %v2473
        %v2475 = vpop.f32.mrf.mxu0
        %v2476 = vadd.f32 %v1975, %v2475
        %v2477 = vpop.f32.mrf.mxu0
        %v2478 = vadd.f32 %v1980, %v2477
        %v2479 = vpop.f32.mrf.mxu0
        %v2480 = vadd.f32 %v1980, %v2479
        %2481 = vmatprep.mubr.bf16.mxu0 0
        %2482 = vmatmul.mubr.bf16.gmra.mxu0 %v2049
        %v2483 = vpop.f32.mrf.mxu0
        %v2484 = vadd.f32 %v1985, %v2483
        %v2485 = vpop.f32.mrf.mxu0
        %v2486 = vadd.f32 %v1985, %v2485
        %v2487 = vpop.f32.mrf.mxu0
        %v2488 = vadd.f32 %v1990, %v2487
        %v2489 = vpop.f32.mrf.mxu0
        %v2490 = vadd.f32 %v1990, %v2489
        %2491 = vmatprep.mubr.bf16.mxu0 0
        %2492 = vmatmul.mubr.bf16.gmra.mxu0 %v2050
        %v2493 = vpop.f32.mrf.mxu0
        %v2494 = vadd.f32 %v1995, %v2493
        %v2495 = vpop.f32.mrf.mxu0
        %v2496 = vadd.f32 %v1995, %v2495
        %v2497 = vpop.f32.mrf.mxu0
        %v2498 = vadd.f32 %v2000, %v2497
        %v2499 = vpop.f32.mrf.mxu0
        %v2500 = vadd.f32 %v2000, %v2499
        %2501 = vmatprep.mubr.bf16.mxu0 0
        %2502 = vmatmul.mubr.bf16.gmra.mxu0 %v2051
        %v2503 = vpop.f32.mrf.mxu0
        %v2504 = vadd.f32 %v2005, %v2503
        %v2505 = vpop.f32.mrf.mxu0
        %v2506 = vadd.f32 %v2005, %v2505
        %v2507 = vpop.f32.mrf.mxu0
        %v2508 = vadd.f32 %v2010, %v2507
        %v2509 = vpop.f32.mrf.mxu0
        %v2510 = vadd.f32 %v2010, %v2509
        %2511 = vdwg.mxu0
        %v2512 = vmax.f32 %v2095, 0.0
        %v2513 = vmax.f32 %v2097, 0.0
        %v2514 = vmax.f32 %v2208, 0.0
        %v2515 = vmax.f32 %v2210, 0.0
        %v2516 = vmax.f32 %v2321, 0.0
        %v2517 = vmax.f32 %v2323, 0.0
        %v2518 = vmax.f32 %v2434, 0.0
        %v2519 = vmax.f32 %v2436, 0.0
        %v2520 = vmax.f32 %v2099, 0.0
        %v2521 = vmax.f32 %v2101, 0.0
        %v2522 = vmax.f32 %v2212, 0.0
        %v2523 = vmax.f32 %v2214, 0.0
        %v2524 = vmax.f32 %v2325, 0.0
        %v2525 = vmax.f32 %v2327, 0.0
        %v2526 = vmax.f32 %v2438, 0.0
        %v2527 = vmax.f32 %v2440, 0.0
        %v2528 = vmax.f32 %v2105, 0.0
        %v2529 = vmax.f32 %v2107, 0.0
        %v2530 = vmax.f32 %v2218, 0.0
        %v2531 = vmax.f32 %v2220, 0.0
        %v2532 = vmax.f32 %v2331, 0.0
        %v2533 = vmax.f32 %v2333, 0.0
        %v2534 = vmax.f32 %v2444, 0.0
        %v2535 = vmax.f32 %v2446, 0.0
        %v2536 = vmax.f32 %v2109, 0.0
        %v2537 = vmax.f32 %v2111, 0.0
        %v2538 = vmax.f32 %v2222, 0.0
        %v2539 = vmax.f32 %v2224, 0.0
        %v2540 = vmax.f32 %v2335, 0.0
        %v2541 = vmax.f32 %v2337, 0.0
        %v2542 = vmax.f32 %v2448, 0.0
        %v2543 = vmax.f32 %v2450, 0.0
        %v2544 = vmax.f32 %v2115, 0.0
        %v2545 = vmax.f32 %v2117, 0.0
        %v2546 = vmax.f32 %v2228, 0.0
        %v2547 = vmax.f32 %v2230, 0.0
        %v2548 = vmax.f32 %v2341, 0.0
        %v2549 = vmax.f32 %v2343, 0.0
        %v2550 = vmax.f32 %v2454, 0.0
        %v2551 = vmax.f32 %v2456, 0.0
        %v2552 = vmax.f32 %v2119, 0.0
        %v2553 = vmax.f32 %v2121, 0.0
        %v2554 = vmax.f32 %v2232, 0.0
        %v2555 = vmax.f32 %v2234, 0.0
        %v2556 = vmax.f32 %v2345, 0.0
        %v2557 = vmax.f32 %v2347, 0.0
        %v2558 = vmax.f32 %v2458, 0.0
        %v2559 = vmax.f32 %v2460, 0.0
        %v2560 = vmax.f32 %v2125, 0.0
        %v2561 = vmax.f32 %v2127, 0.0
        %v2562 = vmax.f32 %v2238, 0.0
        %v2563 = vmax.f32 %v2240, 0.0
        %v2564 = vmax.f32 %v2351, 0.0
        %v2565 = vmax.f32 %v2353, 0.0
        %v2566 = vmax.f32 %v2464, 0.0
        %v2567 = vmax.f32 %v2466, 0.0
        %v2568 = vmax.f32 %v2129, 0.0
        %v2569 = vmax.f32 %v2131, 0.0
        %v2570 = vmax.f32 %v2242, 0.0
        %v2571 = vmax.f32 %v2244, 0.0
        %v2572 = vmax.f32 %v2355, 0.0
        %v2573 = vmax.f32 %v2357, 0.0
        %v2574 = vmax.f32 %v2468, 0.0
        %v2575 = vmax.f32 %v2470, 0.0
        %v2576 = vmax.f32 %v2135, 0.0
        %v2577 = vmax.f32 %v2137, 0.0
        %v2578 = vmax.f32 %v2248, 0.0
        %v2579 = vmax.f32 %v2250, 0.0
        %v2580 = vmax.f32 %v2361, 0.0
        %v2581 = vmax.f32 %v2363, 0.0
        %v2582 = vmax.f32 %v2474, 0.0
        %v2583 = vmax.f32 %v2476, 0.0
        %v2584 = vmax.f32 %v2139, 0.0
        %v2585 = vmax.f32 %v2141, 0.0
        %v2586 = vmax.f32 %v2252, 0.0
        %v2587 = vmax.f32 %v2254, 0.0
        %v2588 = vmax.f32 %v2365, 0.0
        %v2589 = vmax.f32 %v2367, 0.0
        %v2590 = vmax.f32 %v2478, 0.0
        %v2591 = vmax.f32 %v2480, 0.0
        %v2592 = vmax.f32 %v2145, 0.0
        %v2593 = vmax.f32 %v2147, 0.0
        %v2594 = vmax.f32 %v2258, 0.0
        %v2595 = vmax.f32 %v2260, 0.0
        %v2596 = vmax.f32 %v2371, 0.0
        %v2597 = vmax.f32 %v2373, 0.0
        %v2598 = vmax.f32 %v2484, 0.0
        %v2599 = vmax.f32 %v2486, 0.0
        %v2600 = vmax.f32 %v2149, 0.0
        %v2601 = vmax.f32 %v2151, 0.0
        %v2602 = vmax.f32 %v2262, 0.0
        %v2603 = vmax.f32 %v2264, 0.0
        %v2604 = vmax.f32 %v2375, 0.0
        %v2605 = vmax.f32 %v2377, 0.0
        %v2606 = vmax.f32 %v2488, 0.0
        %v2607 = vmax.f32 %v2490, 0.0
        %v2608 = vmax.f32 %v2155, 0.0
        %v2609 = vmax.f32 %v2157, 0.0
        %v2610 = vmax.f32 %v2268, 0.0
        %v2611 = vmax.f32 %v2270, 0.0
        %v2612 = vmax.f32 %v2381, 0.0
        %v2613 = vmax.f32 %v2383, 0.0
        %v2614 = vmax.f32 %v2494, 0.0
        %v2615 = vmax.f32 %v2496, 0.0
        %v2616 = vmax.f32 %v2159, 0.0
        %v2617 = vmax.f32 %v2161, 0.0
        %v2618 = vmax.f32 %v2272, 0.0
        %v2619 = vmax.f32 %v2274, 0.0
        %v2620 = vmax.f32 %v2385, 0.0
        %v2621 = vmax.f32 %v2387, 0.0
        %v2622 = vmax.f32 %v2498, 0.0
        %v2623 = vmax.f32 %v2500, 0.0
        %v2624 = vmax.f32 %v2165, 0.0
        %v2625 = vmax.f32 %v2167, 0.0
        %v2626 = vmax.f32 %v2278, 0.0
        %v2627 = vmax.f32 %v2280, 0.0
        %v2628 = vmax.f32 %v2391, 0.0
        %v2629 = vmax.f32 %v2393, 0.0
        %v2630 = vmax.f32 %v2504, 0.0
        %v2631 = vmax.f32 %v2506, 0.0
        %v2632 = vmax.f32 %v2169, 0.0
        %v2633 = vmax.f32 %v2171, 0.0
        %v2634 = vmax.f32 %v2282, 0.0
        %v2635 = vmax.f32 %v2284, 0.0
        %v2636 = vmax.f32 %v2395, 0.0
        %v2637 = vmax.f32 %v2397, 0.0
        %v2638 = vmax.f32 %v2508, 0.0
        %v2639 = vmax.f32 %v2510, 0.0
        %v2640 = vld [vmem:[%s6] sm:$0xf]
        %v2641 = vpack.c.bf16 %v2520, %v2512
        %v2642 = vpack.c.bf16 %v2521, %v2513
        %v2643 = vpack.c.bf16 %v2522, %v2514
        %v2644 = vpack.c.bf16 %v2523, %v2515
        %v2645 = vpack.c.bf16 %v2524, %v2516
        %v2646 = vpack.c.bf16 %v2525, %v2517
        %v2647 = vpack.c.bf16 %v2526, %v2518
        %v2648 = vpack.c.bf16 %v2527, %v2519
        %v2649 = vpack.c.bf16 %v2536, %v2528
        %v2650 = vpack.c.bf16 %v2537, %v2529
        %v2651 = vpack.c.bf16 %v2538, %v2530
        %v2652 = vpack.c.bf16 %v2539, %v2531
        %v2653 = vpack.c.bf16 %v2540, %v2532
        %v2654 = vpack.c.bf16 %v2541, %v2533
        %v2655 = vpack.c.bf16 %v2542, %v2534
        %v2656 = vpack.c.bf16 %v2543, %v2535
        %v2657 = vpack.c.bf16 %v2552, %v2544
        %v2658 = vpack.c.bf16 %v2553, %v2545
        %v2659 = vpack.c.bf16 %v2554, %v2546
        %v2660 = vpack.c.bf16 %v2555, %v2547
        %v2661 = vpack.c.bf16 %v2556, %v2548
        %v2662 = vpack.c.bf16 %v2557, %v2549
        %v2663 = vpack.c.bf16 %v2558, %v2550
        %v2664 = vpack.c.bf16 %v2559, %v2551
        %v2665 = vpack.c.bf16 %v2568, %v2560
        %v2666 = vpack.c.bf16 %v2569, %v2561
        %v2667 = vpack.c.bf16 %v2570, %v2562
        %v2668 = vpack.c.bf16 %v2571, %v2563
        %v2669 = vpack.c.bf16 %v2572, %v2564
        %v2670 = vpack.c.bf16 %v2573, %v2565
        %v2671 = vpack.c.bf16 %v2574, %v2566
        %v2672 = vpack.c.bf16 %v2575, %v2567
        %v2673 = vpack.c.bf16 %v2584, %v2576
        %v2674 = vpack.c.bf16 %v2585, %v2577
        %v2675 = vpack.c.bf16 %v2586, %v2578
        %v2676 = vpack.c.bf16 %v2587, %v2579
        %v2677 = vpack.c.bf16 %v2588, %v2580
        %v2678 = vpack.c.bf16 %v2589, %v2581
        %v2679 = vpack.c.bf16 %v2590, %v2582
        %v2680 = vpack.c.bf16 %v2591, %v2583
        %v2681 = vpack.c.bf16 %v2600, %v2592
        %v2682 = vpack.c.bf16 %v2601, %v2593
        %v2683 = vpack.c.bf16 %v2602, %v2594
        %v2684 = vpack.c.bf16 %v2603, %v2595
        %v2685 = vpack.c.bf16 %v2604, %v2596
        %v2686 = vpack.c.bf16 %v2605, %v2597
        %v2687 = vpack.c.bf16 %v2606, %v2598
        %v2688 = vpack.c.bf16 %v2607, %v2599
        %v2689 = vpack.c.bf16 %v2616, %v2608
        %v2690 = vpack.c.bf16 %v2617, %v2609
        %v2691 = vpack.c.bf16 %v2618, %v2610
        %v2692 = vpack.c.bf16 %v2619, %v2611
        %v2693 = vpack.c.bf16 %v2620, %v2612
        %v2694 = vpack.c.bf16 %v2621, %v2613
        %v2695 = vpack.c.bf16 %v2622, %v2614
        %v2696 = vpack.c.bf16 %v2623, %v2615
        %v2697 = vpack.c.bf16 %v2632, %v2624
        %v2698 = vpack.c.bf16 %v2633, %v2625
        %v2699 = vpack.c.bf16 %v2634, %v2626
        %v2700 = vpack.c.bf16 %v2635, %v2627
        %v2701 = vpack.c.bf16 %v2636, %v2628
        %v2702 = vpack.c.bf16 %v2637, %v2629
        %v2703 = vpack.c.bf16 %v2638, %v2630
        %v2704 = vpack.c.bf16 %v2639, %v2631
        %v2705 = vld [vmem:[%s7] sm:$0xff]
        %2707 = vset.pattern.permute.xlu0 0
        %2708 = vperm.xlu0 %2707, %v2705
        %v2709 = vpop.permute.xlu0 %2708
        %2711 = vmatprep.subr.bf16.mxu0 %v2698
        %2712 = vmatpush1.bf16.msra.mxu0 %v2697
        %2713 = vmatprep.subr.bf16.mxu0 %v2690
        %2714 = vmatpush1.bf16.msra.mxu0 %v2689
        %2715 = vmatprep.subr.bf16.mxu0 %v2682
        %2716 = vmatpush1.bf16.msra.mxu0 %v2681
        %2717 = vmatprep.subr.bf16.mxu0 %v2674
        %2718 = vmatpush1.bf16.msra.mxu0 %v2673
        %2719 = vmatprep.subr.bf16.mxu0 %v2666
        %2720 = vmatpush1.bf16.msra.mxu0 %v2665
        %2721 = vmatprep.subr.bf16.mxu0 %v2658
        %2722 = vmatpush1.bf16.msra.mxu0 %v2657
        %2723 = vmatprep.subr.bf16.mxu0 %v2650
        %2724 = vmatpush1.bf16.msra.mxu0 %v2649
        %2725 = vmatprep.subr.bf16.mxu0 %v2642
        %2726 = vmatpush1.bf16.msra.mxu0 %v2641
        %2727 = vmatprep.subr.bf16.mxu0 0
        %2728 = vmatpush2.bf16.msra.mxu0 0
        %2729 = vmatprep.subr.bf16.mxu0 0
        %2730 = vmatpush2.bf16.msra.mxu0 0
        %2731 = vmatprep.subr.bf16.mxu0 0
        %2732 = vmatpush2.bf16.msra.mxu0 0
        %2733 = vmatprep.subr.bf16.mxu0 0
        %2734 = vmatpush2.bf16.msra.mxu0 0
        %2735 = vmatprep.subr.bf16.mxu0 0
        %2736 = vmatpush2.bf16.msra.mxu0 0
        %2737 = vmatprep.subr.bf16.mxu0 0
        %2738 = vmatpush2.bf16.msra.mxu0 0
        %2739 = vmatprep.subr.bf16.mxu0 0
        %2740 = vmatpush2.bf16.msra.mxu0 0
        %2741 = vmatprep.subr.bf16.mxu0 0
        %2742 = vmatpush2.bf16.msra.mxu0 0
        %2743 = vmatprep.mubr.bf16.mxu0 0
        %2744 = vmatmul.mubr.bf16.gmra.mxu0 %v2640
        %v2745 = vpop.f32.mrf.mxu0
        %v2746 = vadd.f32 %v2709, %v2745
        %v2747 = vpop.f32.mrf.mxu0
        %v2748 = vadd.f32 %v2709, %v2747
        %v2749 = vpop.f32.mrf.mxu0
        %v2750 = vpop.f32.mrf.mxu0
        %2751 = vdwg.mxu0
        %2752 = vmatprep.subr.bf16.mxu0 %v2700
        %2753 = vmatpush1.bf16.msra.mxu0 %v2699
        %2754 = vmatprep.subr.bf16.mxu0 %v2692
        %2755 = vmatpush1.bf16.msra.mxu0 %v2691
        %2756 = vmatprep.subr.bf16.mxu0 %v2684
        %2757 = vmatpush1.bf16.msra.mxu0 %v2683
        %2758 = vmatprep.subr.bf16.mxu0 %v2676
        %2759 = vmatpush1.bf16.msra.mxu0 %v2675
        %2760 = vmatprep.subr.bf16.mxu0 %v2668
        %2761 = vmatpush1.bf16.msra.mxu0 %v2667
        %2762 = vmatprep.subr.bf16.mxu0 %v2660
        %2763 = vmatpush1.bf16.msra.mxu0 %v2659
        %2764 = vmatprep.subr.bf16.mxu0 %v2652
        %2765 = vmatpush1.bf16.msra.mxu0 %v2651
        %2766 = vmatprep.subr.bf16.mxu0 %v2644
        %2767 = vmatpush1.bf16.msra.mxu0 %v2643
        %2768 = vmatprep.subr.bf16.mxu0 0
        %2769 = vmatpush2.bf16.msra.mxu0 0
        %2770 = vmatprep.subr.bf16.mxu0 0
        %2771 = vmatpush2.bf16.msra.mxu0 0
        %2772 = vmatprep.subr.bf16.mxu0 0
        %2773 = vmatpush2.bf16.msra.mxu0 0
        %2774 = vmatprep.subr.bf16.mxu0 0
        %2775 = vmatpush2.bf16.msra.mxu0 0
        %2776 = vmatprep.subr.bf16.mxu0 0
        %2777 = vmatpush2.bf16.msra.mxu0 0
        %2778 = vmatprep.subr.bf16.mxu0 0
        %2779 = vmatpush2.bf16.msra.mxu0 0
        %2780 = vmatprep.subr.bf16.mxu0 0
        %2781 = vmatpush2.bf16.msra.mxu0 0
        %2782 = vmatprep.subr.bf16.mxu0 0
        %2783 = vmatpush2.bf16.msra.mxu0 0
        %2784 = vmatprep.mubr.bf16.mxu0 0
        %2785 = vmatmul.mubr.bf16.gmra.mxu0 %v2640
        %v2786 = vpop.f32.mrf.mxu0
        %v2787 = vadd.f32 %v2709, %v2786
        %v2788 = vpop.f32.mrf.mxu0
        %v2789 = vadd.f32 %v2709, %v2788
        %v2790 = vpop.f32.mrf.mxu0
        %v2791 = vpop.f32.mrf.mxu0
        %2792 = vdwg.mxu0
        %2793 = vmatprep.subr.bf16.mxu0 %v2702
        %2794 = vmatpush1.bf16.msra.mxu0 %v2701
        %2795 = vmatprep.subr.bf16.mxu0 %v2694
        %2796 = vmatpush1.bf16.msra.mxu0 %v2693
        %2797 = vmatprep.subr.bf16.mxu0 %v2686
        %2798 = vmatpush1.bf16.msra.mxu0 %v2685
        %2799 = vmatprep.subr.bf16.mxu0 %v2678
        %2800 = vmatpush1.bf16.msra.mxu0 %v2677
        %2801 = vmatprep.subr.bf16.mxu0 %v2670
        %2802 = vmatpush1.bf16.msra.mxu0 %v2669
        %2803 = vmatprep.subr.bf16.mxu0 %v2662
        %2804 = vmatpush1.bf16.msra.mxu0 %v2661
        %2805 = vmatprep.subr.bf16.mxu0 %v2654
        %2806 = vmatpush1.bf16.msra.mxu0 %v2653
        %2807 = vmatprep.subr.bf16.mxu0 %v2646
        %2808 = vmatpush1.bf16.msra.mxu0 %v2645
        %2809 = vmatprep.subr.bf16.mxu0 0
        %2810 = vmatpush2.bf16.msra.mxu0 0
        %2811 = vmatprep.subr.bf16.mxu0 0
        %2812 = vmatpush2.bf16.msra.mxu0 0
        %2813 = vmatprep.subr.bf16.mxu0 0
        %2814 = vmatpush2.bf16.msra.mxu0 0
        %2815 = vmatprep.subr.bf16.mxu0 0
        %2816 = vmatpush2.bf16.msra.mxu0 0
        %2817 = vmatprep.subr.bf16.mxu0 0
        %2818 = vmatpush2.bf16.msra.mxu0 0
        %2819 = vmatprep.subr.bf16.mxu0 0
        %2820 = vmatpush2.bf16.msra.mxu0 0
        %2821 = vmatprep.subr.bf16.mxu0 0
        %2822 = vmatpush2.bf16.msra.mxu0 0
        %2823 = vmatprep.subr.bf16.mxu0 0
        %2824 = vmatpush2.bf16.msra.mxu0 0
        %2825 = vmatprep.mubr.bf16.mxu0 0
        %2826 = vmatmul.mubr.bf16.gmra.mxu0 %v2640
        %v2827 = vpop.f32.mrf.mxu0
        %v2828 = vadd.f32 %v2709, %v2827
        %v2829 = vpop.f32.mrf.mxu0
        %v2830 = vadd.f32 %v2709, %v2829
        %v2831 = vpop.f32.mrf.mxu0
        %v2832 = vpop.f32.mrf.mxu0
        %2833 = vdwg.mxu0
        %2834 = vmatprep.subr.bf16.mxu0 %v2704
        %2835 = vmatpush1.bf16.msra.mxu0 %v2703
        %2836 = vmatprep.subr.bf16.mxu0 %v2696
        %2837 = vmatpush1.bf16.msra.mxu0 %v2695
        %2838 = vmatprep.subr.bf16.mxu0 %v2688
        %2839 = vmatpush1.bf16.msra.mxu0 %v2687
        %2840 = vmatprep.subr.bf16.mxu0 %v2680
        %2841 = vmatpush1.bf16.msra.mxu0 %v2679
        %2842 = vmatprep.subr.bf16.mxu0 %v2672
        %2843 = vmatpush1.bf16.msra.mxu0 %v2671
        %2844 = vmatprep.subr.bf16.mxu0 %v2664
        %2845 = vmatpush1.bf16.msra.mxu0 %v2663
        %2846 = vmatprep.subr.bf16.mxu0 %v2656
        %2847 = vmatpush1.bf16.msra.mxu0 %v2655
        %2848 = vmatprep.subr.bf16.mxu0 %v2648
        %2849 = vmatpush1.bf16.msra.mxu0 %v2647
        %2850 = vmatprep.subr.bf16.mxu0 0
        %2851 = vmatpush2.bf16.msra.mxu0 0
        %2852 = vmatprep.subr.bf16.mxu0 0
        %2853 = vmatpush2.bf16.msra.mxu0 0
        %2854 = vmatprep.subr.bf16.mxu0 0
        %2855 = vmatpush2.bf16.msra.mxu0 0
        %2856 = vmatprep.subr.bf16.mxu0 0
        %2857 = vmatpush2.bf16.msra.mxu0 0
        %2858 = vmatprep.subr.bf16.mxu0 0
        %2859 = vmatpush2.bf16.msra.mxu0 0
        %2860 = vmatprep.subr.bf16.mxu0 0
        %2861 = vmatpush2.bf16.msra.mxu0 0
        %2862 = vmatprep.subr.bf16.mxu0 0
        %2863 = vmatpush2.bf16.msra.mxu0 0
        %2864 = vmatprep.subr.bf16.mxu0 0
        %2865 = vmatpush2.bf16.msra.mxu0 0
        %2866 = vmatprep.mubr.bf16.mxu0 0
        %2867 = vmatmul.mubr.bf16.gmra.mxu0 %v2640
        %v2868 = vpop.f32.mrf.mxu0
        %v2869 = vadd.f32 %v2709, %v2868
        %v2870 = vpop.f32.mrf.mxu0
        %v2871 = vadd.f32 %v2709, %v2870
        %v2872 = vpop.f32.mrf.mxu0
        %v2873 = vpop.f32.mrf.mxu0
        %2874 = vdwg.mxu0
        %v2883 = vcombine.low %v2746, %v2748
        %v2884 = vcombine.low %v2787, %v2789
        %v2885 = vcombine.low %v2828, %v2830
        %v2886 = vcombine.low %v2869, %v2871
        %v2888 = vunpack.c.l.s4 1966171168
        %v2889 = vunpack.c.0.s8 %v2888
        %v2890 = vlaneseq
        %v2891 = vshrl.u32 %v2890, 7
        %v2892 = vsub.s32 %v2889, %v2891
        %v2893 = vrot.slane %v2883, %v2892
        %v2895 = vunpack.c.l.s4 1966171168
        %v2896 = vunpack.c.0.s8 %v2895
        %v2897 = vlaneseq
        %v2898 = vshrl.u32 %v2897, 7
        %v2899 = vsub.s32 %v2896, %v2898
        %v2900 = vrot.slane %v2884, %v2899
        %v2902 = vunpack.c.l.s4 1966171168
        %v2903 = vunpack.c.0.s8 %v2902
        %v2904 = vlaneseq
        %v2905 = vshrl.u32 %v2904, 7
        %v2906 = vsub.s32 %v2903, %v2905
        %v2907 = vrot.slane %v2885, %v2906
        %v2909 = vunpack.c.l.s4 1966171168
        %v2910 = vunpack.c.0.s8 %v2909
        %v2911 = vlaneseq
        %v2912 = vshrl.u32 %v2911, 7
        %v2913 = vsub.s32 %v2910, %v2912
        %v2914 = vrot.slane %v2886, %v2913
        %v2915 = vcombine.low %v2893, %v2900
        %v2916 = vcombine.low %v2907, %v2914
        %v2918 = vunpack.c.l.s4 1966171168
        %v2919 = vunpack.c.0.s8 %v2918
        %v2920 = vlaneseq
        %v2921 = vshrl.u32 %v2920, 7
        %v2922 = vsub.s32 %v2919, %v2921
        %v2923 = vrot.slane %v2915, %v2922
        %v2925 = vunpack.c.l.s4 1966171168
        %v2926 = vunpack.c.0.s8 %v2925
        %v2927 = vlaneseq
        %v2928 = vshrl.u32 %v2927, 7
        %v2929 = vsub.s32 %v2926, %v2928
        %v2930 = vrot.slane %v2916, %v2929
        %v2931 = vcombine.low %v2923, %v2930
        %2933 = vst [vmem:[%s299] sm:$0xff] %v2931
        %s2934 = sand.u32 %s203, 1
        %s2935 = scalar_lea.sflag [#allocation3], %s2934
        %s2936 = sand.u32 %s203, 1
        %s2937 = smul.addr %s2936, 8
        %s2938 = scalar_lea.vmem [#allocation2], %s2937
        // Predicated region
        $region53: #{tpu_custom_call.1} parent=51 // pred_check
          %p2939 = pneg %p213
        $region54: #{tpu_custom_call.1} parent=51 // pred_check_branch
          %2941 = sbr.rel (%p2939) target = $region56
        $region55: #{tpu_custom_call.1} parent=51 // pred_region
          %s2942 = smul.u32 8, %s22
          %s2944 = ssub.s32 128, 128
          %2945 = vsyncadd %s2935, %s2944
          %s2946 = smul.addr %s2942, 16
          %s2947 = scalar_lea.hbm %s8, %s2946
          %s2949 = sshll.u32 %s2938, 4
          %s2950 = int_to_ptr.vmem [resolvable:$true] %s2949
          %2952 = dma.vmem_to_hbm [thread:$0]  %s2950, 128, %s2947, %s2935
        $region56: #{tpu_custom_call.1} parent=51 // pred_fallthru
          _
      $region52: #{tpu_custom_call.1} parent=5 // pred_fallthru
        _
      %p2953 = scmp.le.s32.totalorder 2, %s17
      // Predicated region
      $region57: #{tpu_custom_call.1} parent=5 // pred_check
        %p2954 = pneg %p2953
      $region58: #{tpu_custom_call.1} parent=5 // pred_check_branch
        %2956 = sbr.rel (%p2954) target = $region60
      $region59: #{tpu_custom_call.1} parent=5 // pred_region
        %s2957 = ssub.s32 %s17, 2
        // Predicated region
        $region61: #{tpu_custom_call.1} parent=59 // pred_check
          %p2958 = pneg %p219
        $region62: #{tpu_custom_call.1} parent=59 // pred_check_branch
          %2960 = sbr.rel (%p2958) target = $region64
        $region63: #{tpu_custom_call.1} parent=59 // pred_region
          %s2961 = sand.u32 %s204, 1
          %s2962 = scalar_lea.sflag [#allocation3], %s2961
          %s2963 = sand.u32 %s204, 1
          %s2964 = smul.addr %s2963, 8
          %s2965 = scalar_lea.vmem [#allocation2], %s2964
          %2966 = dma.done %s2962, 128
        $region64: #{tpu_custom_call.1} parent=59 // pred_fallthru
          _
      $region60: #{tpu_custom_call.1} parent=5 // pred_fallthru
        _
    $region6: #{tpu_custom_call.1} parent=1 // loop_footer
      %s21 = sadd.s32 1, %s17
    $region7: #{tpu_custom_call.1} parent=1 // loop_footer_branch
      %16 = sbr.rel target = $region3
    $region8: #{tpu_custom_call.1} parent=1 // loop_exit
      _
    %2967 = vsyncpa [#allocation3], 1
    %s2968 = scalar_lea.sflag [#allocation3], 1
    %2969 = vsyncpa %s2968, 1

</llo_original>
